<compile_context>
chip_gen: v5e
topology: v5e:2x2
jax: 0.10.0
libtpu: 0.0.40
codegen_flags: <defaults>
</compile_context>

<pallas_src>
import functools
import math

import jax
import jax.numpy as jnp
from jax.experimental import pallas as pl
from jax.experimental.pallas import tpu as pltpu


# --------------------------------------------------------------------------
# Per-generation configuration (VMEM budget + tile targets)
# --------------------------------------------------------------------------

@functools.lru_cache(maxsize=None)
def _hw_config():
    vmem_bytes = 0
    try:
        vmem_bytes = int(pltpu.get_tpu_info().vmem_capacity_bytes)
    except Exception:
        pass  # fall through to the conservative (v7x-safe) config
    if vmem_bytes >= 96 * 1024 * 1024:
        # v5e / v6e: 128 MiB VMEM -> big tiles, generous scoped budget.
        return {"vmem_limit": 64 * 1024 * 1024,
                "tm": 512, "tn": 512, "tk": 1024, "tq": 256, "tkv": 256}
    # v7x (64 MiB per TensorCore) or unknown: stay well under budget.
    return {"vmem_limit": 40 * 1024 * 1024,
            "tm": 256, "tn": 256, "tk": 512, "tq": 256, "tkv": 256}


def _tile(dim, target, align):
    """Largest multiple of `align` <= target that divides dim.

    Falls back to the full dim (always a legal block shape) instead of an
    unaligned tile; pad M/K upstream if this matters for VMEM on odd shapes.
    """
    if dim <= target:
        return dim
    t = (min(target, dim) // align) * align
    while t >= align:
        if dim % t == 0:
            return t
        t -= align
    return dim


# --------------------------------------------------------------------------
# Tiled linear (+ optional fused GELU), bf16 activations, f32 accumulation
# --------------------------------------------------------------------------

def _linear_kernel(x_ref, w_ref, b_ref, o_ref, acc_ref, *, activation):
    k = pl.program_id(2)

    @pl.when(k == 0)
    def _():
        acc_ref[...] = jnp.zeros_like(acc_ref)

    acc_ref[...] += jnp.dot(
        x_ref[...].astype(jnp.bfloat16),
        w_ref[...].astype(jnp.bfloat16),
        preferred_element_type=jnp.float32)

    @pl.when(k == pl.num_programs(2) - 1)
    def _():
        y = acc_ref[...] + b_ref[...].astype(jnp.float32)
        if activation == "gelu":
            # tanh-approx GELU (HF BERT uses erf-GELU; numerically very close).
            y = jax.nn.gelu(y, approximate=True)
        o_ref[...] = y.astype(o_ref.dtype)


def pallas_linear(x2d, w, b, activation=None):
    """x2d: (M, K) bf16/f32, w: (K, N) bf16, b: (N,) f32 -> (M, N) bf16."""
    M, K = x2d.shape
    N = w.shape[1]
    cfg = _hw_config()
    tm = _tile(M, cfg["tm"], 8)
    tn = _tile(N, cfg["tn"], 128)
    tk = _tile(K, cfg["tk"], 128)
    grid = (M // tm, N // tn, K // tk)

    cost = pl.CostEstimate(
        flops=2 * M * K * N,
        transcendentals=(M * N if activation == "gelu" else 0),
        bytes_accessed=int(M * K * x2d.dtype.itemsize
                           + K * N * w.dtype.itemsize + M * N * 2 + N * 4))

    kernel = functools.partial(_linear_kernel, activation=activation)
    return pl.pallas_call(
        kernel,
        out_shape=jax.ShapeDtypeStruct((M, N), jnp.bfloat16),
        grid_spec=pltpu.PrefetchScalarGridSpec(
            num_scalar_prefetch=0,
            grid=grid,
            in_specs=[pl.BlockSpec((tm, tk), lambda i, j, k: (i, k)),
                      pl.BlockSpec((tk, tn), lambda i, j, k: (k, j)),
                      pl.BlockSpec((1, tn), lambda i, j, k: (0, j))],
            out_specs=pl.BlockSpec((tm, tn), lambda i, j, k: (i, j)),
            scratch_shapes=[pltpu.VMEM((tm, tn), jnp.float32)]),
        compiler_params=pltpu.CompilerParams(
            dimension_semantics=("parallel", "parallel", "arbitrary"),
            vmem_limit_bytes=cfg["vmem_limit"]),
        cost_estimate=cost,
    )(x2d, w, b.reshape(1, N))


# --------------------------------------------------------------------------
# Tiled linear fused with residual-add + LayerNorm on the writeback
# (full N in one tile so LN stats are complete; one-pass mean / E[x^2])
# --------------------------------------------------------------------------

def _linear_res_ln_kernel(x_ref, w_ref, b_ref, res_ref, g_ref, bet_ref,
                          o_ref, acc_ref, *, eps):
    k = pl.program_id(1)

    @pl.when(k == 0)
    def _():
        acc_ref[...] = jnp.zeros_like(acc_ref)

    acc_ref[...] += jnp.dot(
        x_ref[...].astype(jnp.bfloat16),
        w_ref[...].astype(jnp.bfloat16),
        preferred_element_type=jnp.float32)

    @pl.when(k == pl.num_programs(1) - 1)
    def _():
        y = (acc_ref[...] + b_ref[...].astype(jnp.float32)
             + res_ref[...].astype(jnp.float32))
        s1 = jnp.mean(y, axis=-1, keepdims=True)
        s2 = jnp.mean(y * y, axis=-1, keepdims=True)
        var = jnp.maximum(s2 - s1 * s1, 0.0)
        y = (y - s1) * jax.lax.rsqrt(var + eps)
        o_ref[...] = (y * g_ref[...] + bet_ref[...]).astype(o_ref.dtype)


def pallas_linear_res_ln(x2d, w, b, res2d, gamma, beta, *, eps=1e-12):
    """LayerNorm(x2d @ w + b + residual) -> (M, N) bf16."""
    M, K = x2d.shape
    N = w.shape[1]
    cfg = _hw_config()
    tm = _tile(M, cfg["tm"], 8)
    tk = _tile(K, cfg["tk"], 128)
    grid = (M // tm, K // tk)

    cost = pl.CostEstimate(
        flops=2 * M * K * N + 8 * M * N,
        transcendentals=M,  # rsqrt per row
        bytes_accessed=int(M * K * x2d.dtype.itemsize
                           + K * N * w.dtype.itemsize + 2 * M * N * 2 + 3 * N * 4))

    kernel = functools.partial(_linear_res_ln_kernel, eps=eps)
    return pl.pallas_call(
        kernel,
        out_shape=jax.ShapeDtypeStruct((M, N), jnp.bfloat16),
        grid_spec=pltpu.PrefetchScalarGridSpec(
            num_scalar_prefetch=0,
            grid=grid,
            in_specs=[pl.BlockSpec((tm, tk), lambda i, k: (i, k)),   # x
                      pl.BlockSpec((tk, N), lambda i, k: (k, 0)),    # w
                      pl.BlockSpec((1, N), lambda i, k: (0, 0)),     # bias
                      pl.BlockSpec((tm, N), lambda i, k: (i, 0)),    # residual
                      pl.BlockSpec((1, N), lambda i, k: (0, 0)),     # gamma
                      pl.BlockSpec((1, N), lambda i, k: (0, 0))],    # beta
            out_specs=pl.BlockSpec((tm, N), lambda i, k: (i, 0)),
            scratch_shapes=[pltpu.VMEM((tm, N), jnp.float32)]),
        compiler_params=pltpu.CompilerParams(
            dimension_semantics=("parallel", "arbitrary"),
            vmem_limit_bytes=cfg["vmem_limit"]),
        cost_estimate=cost,
    )(x2d, w, b.reshape(1, N), res2d, gamma.reshape(1, N), beta.reshape(1, N))


# --------------------------------------------------------------------------
# Plain LayerNorm (embedding LN — no residual read), bf16 output
# --------------------------------------------------------------------------

def _ln_kernel(x_ref, g_ref, b_ref, o_ref, *, eps):
    x = x_ref[...].astype(jnp.float32)
    s1 = jnp.mean(x, axis=-1, keepdims=True)
    s2 = jnp.mean(x * x, axis=-1, keepdims=True)
    var = jnp.maximum(s2 - s1 * s1, 0.0)
    y = (x - s1) * jax.lax.rsqrt(var + eps)
    o_ref[...] = (y * g_ref[...] + b_ref[...]).astype(o_ref.dtype)


def pallas_layernorm(x2d, gamma, beta, *, eps=1e-12):
    M, H = x2d.shape
    cfg = _hw_config()
    tm = _tile(M, 512, 8)
    kernel = functools.partial(_ln_kernel, eps=eps)
    return pl.pallas_call(
        kernel,
        out_shape=jax.ShapeDtypeStruct((M, H), jnp.bfloat16),
        grid_spec=pltpu.PrefetchScalarGridSpec(
            num_scalar_prefetch=0,
            grid=(M // tm,),
            in_specs=[pl.BlockSpec((tm, H), lambda i: (i, 0)),
                      pl.BlockSpec((1, H), lambda i: (0, 0)),
                      pl.BlockSpec((1, H), lambda i: (0, 0))],
            out_specs=pl.BlockSpec((tm, H), lambda i: (i, 0))),
        compiler_params=pltpu.CompilerParams(
            dimension_semantics=("parallel",),
            vmem_limit_bytes=cfg["vmem_limit"]),
    )(x2d, gamma.reshape(1, H), beta.reshape(1, H))


# --------------------------------------------------------------------------
# Flash-style attention over (B*S, H) slabs:
#   grid (batch, q_tile, kv_tile), online softmax per head (static head loop),
#   lane-dense full-H context writes, no XLA head split/merge transposes.
# --------------------------------------------------------------------------

def _flash_attn_kernel(q_ref, k_ref, v_ref, m_ref, o_ref,
                       m_sc, l_sc, acc_sc, *, num_heads, head_dim):
    ki = pl.program_id(2)

    @pl.when(ki == 0)
    def _():
        m_sc[...] = jnp.full(m_sc.shape, -jnp.inf, dtype=jnp.float32)
        l_sc[...] = jnp.zeros_like(l_sc)
        acc_sc[...] = jnp.zeros_like(acc_sc)

    mask_row = m_ref[0].astype(jnp.float32)                     # (1, tkv)

    for h in range(num_heads):                                  # static unroll
        lo, hi = h * head_dim, (h + 1) * head_dim
        # 1/sqrt(dH) is pre-folded into the Q projection weights.
        q_h = q_ref[:, lo:hi].astype(jnp.bfloat16)              # (tq, dH)
        k_h = k_ref[:, lo:hi].astype(jnp.bfloat16)              # (tkv, dH)
        # TODO(synk): pre-transpose K in the K-projection epilogue so this
        # contraction is ((1,),(0,)) and the per-step XLU K-tile transpose
        # disappears.
        s = jax.lax.dot_general(q_h, k_h, (((1,), (1,)), ((), ())),
                                preferred_element_type=jnp.float32)  # (tq, tkv)
        s = s + mask_row

        m_prev = m_sc[h]                                        # (tq, 1)
        m_new = jnp.maximum(m_prev, jnp.max(s, axis=-1, keepdims=True))
        alpha = jnp.exp(m_prev - m_new)
        p = jnp.exp(s - m_new)
        l_sc[h] = alpha * l_sc[h] + jnp.sum(p, axis=-1, keepdims=True)
        pv = jnp.dot(p.astype(jnp.bfloat16),
                     v_ref[:, lo:hi].astype(jnp.bfloat16),
                     preferred_element_type=jnp.float32)        # (tq, dH)
        acc_sc[h] = alpha * acc_sc[h] + pv
        m_sc[h] = m_new

    @pl.when(ki == pl.num_programs(2) - 1)
    def _():
        for h in range(num_heads):
            lo, hi = h * head_dim, (h + 1) * head_dim
            inv_l = pl.reciprocal(l_sc[h], approx=True)
            o_ref[:, lo:hi] = (acc_sc[h] * inv_l).astype(o_ref.dtype)


def pallas_flash_attention(q2d, k2d, v2d, add_mask, *, batch, seq, num_heads):
    """q2d/k2d/v2d: (B*S, H) bf16; add_mask: (B, 1, S) additive f32 mask."""
    M, H = q2d.shape
    dH = H // num_heads
    cfg = _hw_config()
    tq = _tile(seq, cfg["tq"], 8)
    tkv = _tile(seq, cfg["tkv"], 128)
    nq, nk = seq // tq, seq // tkv
    grid = (batch, nq, nk)

    cost = pl.CostEstimate(
        flops=4 * batch * num_heads * seq * seq * dH,
        transcendentals=batch * num_heads * seq * seq,
        bytes_accessed=int(4 * M * H * 2 + add_mask.size * 4))

    kernel = functools.partial(_flash_attn_kernel,
                               num_heads=num_heads, head_dim=dH)
    return pl.pallas_call(
        kernel,
        out_shape=jax.ShapeDtypeStruct((M, H), jnp.bfloat16),
        grid_spec=pltpu.PrefetchScalarGridSpec(
            num_scalar_prefetch=0,
            grid=grid,
            in_specs=[pl.BlockSpec((tq, H), lambda b, qi, ki: (b * nq + qi, 0)),
                      pl.BlockSpec((tkv, H), lambda b, qi, ki: (b * nk + ki, 0)),
                      pl.BlockSpec((tkv, H), lambda b, qi, ki: (b * nk + ki, 0)),
                      pl.BlockSpec((1, 1, tkv), lambda b, qi, ki: (b, 0, ki))],
            out_specs=pl.BlockSpec((tq, H), lambda b, qi, ki: (b * nq + qi, 0)),
            scratch_shapes=[pltpu.VMEM((num_heads, tq, 1), jnp.float32),
                            pltpu.VMEM((num_heads, tq, 1), jnp.float32),
                            pltpu.VMEM((num_heads, tq, dH), jnp.float32)]),
        compiler_params=pltpu.CompilerParams(
            dimension_semantics=("parallel", "parallel", "arbitrary"),
            vmem_limit_bytes=cfg["vmem_limit"]),
        cost_estimate=cost,
    )(q2d, k2d, v2d, add_mask)


# --------------------------------------------------------------------------
# Fused tagging classifier (H -> 2) + cross-entropy partials
# ("parallel" grid; per-tile (nll_sum, count) partials reduced in JAX)
# --------------------------------------------------------------------------

def _cls_ce_kernel(h_ref, w_ref, b_ref, lbl_ref, logits_ref, part_ref,
                   *, ignore_id):
    # Logits last dim is 2 (<128 lanes): masked stores, but the kernel is tiny
    # and the module's API requires the logits to be materialized.
    logits = jnp.dot(h_ref[...].astype(jnp.bfloat16),
                     w_ref[...].astype(jnp.bfloat16),
                     preferred_element_type=jnp.float32) + b_ref[...]
    logits_ref[...] = logits.astype(logits_ref.dtype)

    lbl = lbl_ref[...]                                   # (tm, 1) int32
    m = jnp.max(logits, axis=-1, keepdims=True)
    lse = m + jnp.log(jnp.sum(jnp.exp(logits - m), axis=-1, keepdims=True))
    logp = logits - lse                                  # (tm, C)

    valid = lbl != ignore_id                             # (tm, 1)
    safe = jnp.where(valid, lbl, 0)                      # (tm, 1)
    cls_idx = jax.lax.broadcasted_iota(jnp.int32, logits.shape, 1)
    onehot = cls_idx == safe                             # (tm, C)
    picked = jnp.sum(jnp.where(onehot, logp, 0.0), axis=-1, keepdims=True)
    nll = jnp.where(valid, -picked, 0.0)                 # (tm, 1)

    part_ref[0, 0] = jnp.sum(nll)
    part_ref[0, 1] = jnp.sum(valid.astype(jnp.float32))


def pallas_classifier_ce(h2d, w, b, labels, ignore_id):
    """h2d: (M, H) bf16; w: (H, 2); labels: (M,) -> (logits (M,2) f32, mean CE)."""
    M, H = h2d.shape
    C = w.shape[1]
    cfg = _hw_config()
    tm = _tile(M, 512, 8)
    G = M // tm

    kernel = functools.partial(_cls_ce_kernel, ignore_id=ignore_id)
    logits, parts = pl.pallas_call(
        kernel,
        out_shape=(jax.ShapeDtypeStruct((M, C), jnp.float32),
                   jax.ShapeDtypeStruct((G, 2), jnp.float32)),
        grid_spec=pltpu.PrefetchScalarGridSpec(
            num_scalar_prefetch=0,
            grid=(G,),
            in_specs=[pl.BlockSpec((tm, H), lambda i: (i, 0)),
                      pl.BlockSpec((H, C), lambda i: (0, 0)),
                      pl.BlockSpec((1, C), lambda i: (0, 0)),
                      pl.BlockSpec((tm, 1), lambda i: (i, 0))],
            out_specs=[pl.BlockSpec((tm, C), lambda i: (i, 0)),
                       pl.BlockSpec((1, 2), lambda i: (i, 0),
                                    memory_space=pltpu.MemorySpace.SMEM)]),
        compiler_params=pltpu.CompilerParams(
            dimension_semantics=("parallel",),
            vmem_limit_bytes=cfg["vmem_limit"]),
    )(h2d, w, b.reshape(1, C), labels.reshape(M, 1).astype(jnp.int32))

    nll_sum = jnp.sum(parts[:, 0])
    count = jnp.sum(parts[:, 1])
    # TODO(synk): PyTorch returns NaN when every label is ignore_index; the
    # max(count, 1) clamp differs only in that degenerate edge case.
    loss = nll_sum / jnp.maximum(count, 1.0)
    return logits, loss


# --------------------------------------------------------------------------
# Synthetic BERT parameters (deterministic; no checkpoint loading)
# --------------------------------------------------------------------------

def init_params(key, *, vocab, hidden, num_layers, intermediate, max_pos,
                type_vocab, num_heads):
    dH = hidden // num_heads
    q_scale = 1.0 / math.sqrt(dH)

    def nrm(k, shape, dtype=jnp.float32):
        return (0.02 * jax.random.normal(k, shape, dtype=jnp.float32)).astype(dtype)

    keys = jax.random.split(key, 4 + num_layers)
    params = {
        "word_emb": nrm(keys[0], (vocab, hidden)),
        "pos_emb":  nrm(keys[1], (max_pos, hidden)),
        "type_emb": nrm(keys[2], (type_vocab, hidden)),
        "emb_ln_g": jnp.ones((hidden,), jnp.float32),
        "emb_ln_b": jnp.zeros((hidden,), jnp.float32),
        # classifier_tagging: hidden -> 2 (weights bf16 for the MXU)
        "cls_tag_w": nrm(keys[3], (hidden, 2), jnp.bfloat16),
        "cls_tag_b": jnp.zeros((2,), jnp.float32),
        "layers": [],
    }
    for li in range(num_layers):
        lk = jax.random.split(keys[4 + li], 6)
        params["layers"].append({
            # 1/sqrt(dH) folded into the Q projection (hoists the attention
            # inner-loop rescale upstream).
            "w_q": (nrm(lk[0], (hidden, hidden)) * q_scale).astype(jnp.bfloat16),
            "b_q": jnp.zeros((hidden,), jnp.float32),
            "w_k": nrm(lk[1], (hidden, hidden), jnp.bfloat16),
            "b_k": jnp.zeros((hidden,), jnp.float32),
            "w_v": nrm(lk[2], (hidden, hidden), jnp.bfloat16),
            "b_v": jnp.zeros((hidden,), jnp.float32),
            "wo": nrm(lk[3], (hidden, hidden), jnp.bfloat16),
            "bo": jnp.zeros((hidden,), jnp.float32),
            "ln1_g": jnp.ones((hidden,), jnp.float32),
            "ln1_b": jnp.zeros((hidden,), jnp.float32),
            "w1": nrm(lk[4], (hidden, intermediate), jnp.bfloat16),
            "b1": jnp.zeros((intermediate,), jnp.float32),
            "w2": nrm(lk[5], (intermediate, hidden), jnp.bfloat16),
            "b2": jnp.zeros((hidden,), jnp.float32),
            "ln2_g": jnp.ones((hidden,), jnp.float32),
            "ln2_b": jnp.zeros((hidden,), jnp.float32),
        })
    return params


# --------------------------------------------------------------------------
# Forward pass (mirrors BERT_Model.forward)
# --------------------------------------------------------------------------

def bert_model_forward(params, input_ids, attention_mask, token_type_ids, tag_ids,
                       *, num_heads, label_ignore_id):
    B, S = input_ids.shape
    H = params["word_emb"].shape[1]

    # Embeddings (gather in JAX glue) + LayerNorm (Pallas, bf16 out).
    emb = (params["word_emb"][input_ids]
           + params["pos_emb"][:S][None, :, :]
           + params["type_emb"][token_type_ids])                       # (B, S, H)
    h = pallas_layernorm(emb.reshape(B * S, H),
                         params["emb_ln_g"], params["emb_ln_b"])       # (B*S, H) bf16

    # Extended additive attention mask, as in HF BERT: (1 - mask) * -10000.
    add_mask = ((1.0 - attention_mask.astype(jnp.float32)) * -10000.0
                ).reshape(B, 1, S)                                     # (B, 1, S)

    for layer in params["layers"]:
        # Separate Q/K/V projections -> (B*S, H) bf16 slabs that attention
        # reads directly (no XLA head split/merge transposes).
        q = pallas_linear(h, layer["w_q"], layer["b_q"])
        k = pallas_linear(h, layer["w_k"], layer["b_k"])
        v = pallas_linear(h, layer["w_v"], layer["b_v"])

        ctx = pallas_flash_attention(q, k, v, add_mask,
                                     batch=B, seq=S, num_heads=num_heads)

        # Output projection fused with residual + LayerNorm.
        h = pallas_linear_res_ln(ctx, layer["wo"], layer["bo"], h,
                                 layer["ln1_g"], layer["ln1_b"])
        # FFN: up-proj with fused GELU, down-proj fused with residual + LN.
        ffn = pallas_linear(h, layer["w1"], layer["b1"], activation="gelu")
        h = pallas_linear_res_ln(ffn, layer["w2"], layer["b2"], h,
                                 layer["ln2_g"], layer["ln2_b"])

    # classifier_tagging + cross-entropy (parallel partial sums, mean in JAX).
    logits_tag_2d, loss2 = pallas_classifier_ce(
        h, params["cls_tag_w"], params["cls_tag_b"],
        tag_ids.reshape(-1), label_ignore_id)
    return loss2, logits_tag_2d.reshape(B, S, 2)


# --------------------------------------------------------------------------
# Main
# --------------------------------------------------------------------------

if __name__ == "__main__":
    # Small synthetic config consistent with the module's forward.
    B, S = 2, 8
    VOCAB, HIDDEN, HEADS, LAYERS, INTER = 100, 32, 2, 2, 64
    MAX_POS, TYPE_VOCAB = 32, 2
    LABEL_IGNORE_ID = -100

    key = jax.random.PRNGKey(0)
    k_params, k_ids, k_tags = jax.random.split(key, 3)

    params = init_params(k_params, vocab=VOCAB, hidden=HIDDEN, num_layers=LAYERS,
                         intermediate=INTER, max_pos=MAX_POS,
                         type_vocab=TYPE_VOCAB, num_heads=HEADS)

    input_ids = jax.random.randint(k_ids, (B, S), 0, VOCAB, dtype=jnp.int32)
    attention_mask = jnp.array([[1, 1, 1, 1, 1, 1, 1, 1],
                                [1, 1, 1, 1, 1, 1, 0, 0]], dtype=jnp.int32)
    token_type_ids = jnp.zeros((B, S), dtype=jnp.int32)
    tag_ids = jax.random.randint(k_tags, (B, S), 0, 2, dtype=jnp.int32)
    tag_ids = jnp.where(attention_mask == 1, tag_ids, LABEL_IGNORE_ID)

    forward = jax.jit(functools.partial(
        bert_model_forward, num_heads=HEADS, label_ignore_id=LABEL_IGNORE_ID))

    loss2, logits_tag = forward(params, input_ids, attention_mask,
                                token_type_ids, tag_ids)

    jax.block_until_ready((loss2, logits_tag))
    assert logits_tag.shape == (B, S, 2)
    assert loss2.shape == ()
    assert bool(jnp.isfinite(loss2))
    print("KERNEL_OK")
</pallas_src>

<mosaic_0001>
module attributes {stable_mosaic.version = 11 : i64} {
  func.func @_ln_kernel(%arg0: i32, %arg1: memref<16x32xf32, #tpu.memory_space<vmem>>, %arg2: memref<1x32xf32, #tpu.memory_space<vmem>>, %arg3: memref<1x32xf32, #tpu.memory_space<vmem>>, %arg4: memref<16x32xbf16, #tpu.memory_space<vmem>>) attributes {dimension_semantics = [#tpu.dimension_semantics<parallel>], iteration_bounds = array<i64: 1>, scalar_prefetch = 0 : i64, scratch_operands = 0 : i64, tpu.core_type = #tpu.core_type<tc>, window_params = [{transform_indices = @transform_0, window_bounds = array<i64: 16, 32>}, {pipeline_mode = #tpu.pipeline_mode<synchronous>, transform_indices = @transform_1, window_bounds = array<i64: 1, 32>}, {pipeline_mode = #tpu.pipeline_mode<synchronous>, transform_indices = @transform_2, window_bounds = array<i64: 1, 32>}, {transform_indices = @transform_3, window_bounds = array<i64: 16, 32>}]} {
    %c0 = arith.constant 0 : index
    %c0_0 = arith.constant 0 : index
    %0 = vector.load %arg1[%c0, %c0_0] : memref<16x32xf32, #tpu.memory_space<vmem>>, vector<16x32xf32>
    %cst = arith.constant dense<0.000000e+00> : vector<16xf32>
    %1 = vector.multi_reduction <add>, %0, %cst [1] : vector<16x32xf32> to vector<16xf32>
    %2 = vector.shape_cast %1 : vector<16xf32> to vector<16x1xf32>
    %cst_1 = arith.constant 3.200000e+01 : f32
    %3 = vector.broadcast %cst_1 : f32 to vector<16x1xf32>
    %4 = arith.divf %2, %3 : vector<16x1xf32>
    %5 = arith.mulf %0, %0 : vector<16x32xf32>
    %cst_2 = arith.constant dense<0.000000e+00> : vector<16xf32>
    %6 = vector.multi_reduction <add>, %5, %cst_2 [1] : vector<16x32xf32> to vector<16xf32>
    %7 = vector.shape_cast %6 : vector<16xf32> to vector<16x1xf32>
    %cst_3 = arith.constant 3.200000e+01 : f32
    %8 = vector.broadcast %cst_3 : f32 to vector<16x1xf32>
    %9 = arith.divf %7, %8 : vector<16x1xf32>
    %10 = arith.mulf %4, %4 : vector<16x1xf32>
    %11 = arith.subf %9, %10 : vector<16x1xf32>
    %cst_4 = arith.constant 0.000000e+00 : f32
    %12 = vector.broadcast %cst_4 : f32 to vector<16x1xf32>
    %13 = arith.maximumf %11, %12 : vector<16x1xf32>
    %14 = vector.broadcast %4 : vector<16x1xf32> to vector<16x32xf32>
    %15 = arith.subf %0, %14 : vector<16x32xf32>
    %cst_5 = arith.constant 9.99999996E-13 : f32
    %16 = vector.broadcast %cst_5 : f32 to vector<16x1xf32>
    %17 = arith.addf %13, %16 : vector<16x1xf32>
    %18 = math.rsqrt %17 : vector<16x1xf32>
    %19 = vector.broadcast %18 : vector<16x1xf32> to vector<16x32xf32>
    %20 = arith.mulf %15, %19 : vector<16x32xf32>
    %c0_6 = arith.constant 0 : index
    %c0_7 = arith.constant 0 : index
    %21 = vector.load %arg2[%c0_6, %c0_7] : memref<1x32xf32, #tpu.memory_space<vmem>>, vector<1x32xf32>
    %22 = vector.broadcast %21 : vector<1x32xf32> to vector<16x32xf32>
    %23 = arith.mulf %20, %22 : vector<16x32xf32>
    %c0_8 = arith.constant 0 : index
    %c0_9 = arith.constant 0 : index
    %24 = vector.load %arg3[%c0_8, %c0_9] : memref<1x32xf32, #tpu.memory_space<vmem>>, vector<1x32xf32>
    %25 = vector.broadcast %24 : vector<1x32xf32> to vector<16x32xf32>
    %26 = arith.addf %23, %25 : vector<16x32xf32>
    %27 = arith.truncf %26 : vector<16x32xf32> to vector<16x32xbf16>
    %c0_10 = arith.constant 0 : index
    %c0_11 = arith.constant 0 : index
    %28 = vector.load %arg4[%c0_10, %c0_11] : memref<16x32xbf16, #tpu.memory_space<vmem>>, vector<16x32xbf16>
    tpu.vector_store %arg4[%c0_10, %c0_11], %27 {strides = array<i32>} : memref<16x32xbf16, #tpu.memory_space<vmem>>, vector<16x32xbf16>,
    return
  }
  func.func @transform_0(%arg0: i32) -> (i32, i32) {
    %c0_i32 = arith.constant 0 : i32
    %c0_i32_0 = arith.constant 0 : i32
    return %arg0, %c0_i32 : i32, i32
  }
  func.func @transform_1(%arg0: i32) -> (i32, i32) {
    %c0_i32 = arith.constant 0 : i32
    %c0_i32_0 = arith.constant 0 : i32
    %c0_i32_1 = arith.constant 0 : i32
    return %c0_i32, %c0_i32_0 : i32, i32
  }
  func.func @transform_2(%arg0: i32) -> (i32, i32) {
    %c0_i32 = arith.constant 0 : i32
    %c0_i32_0 = arith.constant 0 : i32
    %c0_i32_1 = arith.constant 0 : i32
    return %c0_i32, %c0_i32_0 : i32, i32
  }
  func.func @transform_3(%arg0: i32) -> (i32, i32) {
    %c0_i32 = arith.constant 0 : i32
    %c0_i32_0 = arith.constant 0 : i32
    return %arg0, %c0_i32 : i32, i32
  }
}

module attributes {stable_mosaic.version = 11 : i64} {
  func.func @_flash_attn_kernel(%arg0: i32, %arg1: i32, %arg2: i32, %arg3: memref<8x32xbf16, #tpu.memory_space<vmem>>, %arg4: memref<8x32xbf16, #tpu.memory_space<vmem>>, %arg5: memref<8x32xbf16, #tpu.memory_space<vmem>>, %arg6: memref<1x1x8xf32, #tpu.memory_space<vmem>>, %arg7: memref<8x32xbf16, #tpu.memory_space<vmem>>, %arg8: memref<2x8x1xf32, #tpu.memory_space<vmem>>, %arg9: memref<2x8x1xf32, #tpu.memory_space<vmem>>, %arg10: memref<2x8x16xf32, #tpu.memory_space<vmem>>) attributes {dimension_semantics = [#tpu.dimension_semantics<parallel>, #tpu.dimension_semantics<parallel>, #tpu.dimension_semantics<arbitrary>], iteration_bounds = array<i64: 2, 1, 1>, scalar_prefetch = 0 : i64, scratch_operands = 3 : i64, tpu.core_type = #tpu.core_type<tc>, window_params = [{transform_indices = @transform_0, window_bounds = array<i64: 8, 32>}, {transform_indices = @transform_1, window_bounds = array<i64: 8, 32>}, {transform_indices = @transform_2, window_bounds = array<i64: 8, 32>}, {transform_indices = @transform_3, window_bounds = array<i64: 1, 1, 8>}, {transform_indices = @transform_4, window_bounds = array<i64: 8, 32>}]} {
    %c0_i32 = arith.constant 0 : i32
    %0 = arith.cmpi eq, %arg2, %c0_i32 : i32
    %1 = arith.extui %0 : i1 to i32
    %c0_i32_0 = arith.constant 0 : i32
    %2 = arith.cmpi ne, %1, %c0_i32_0 : i32
    scf.if %2 {
      %cst_58 = arith.constant 0xFF800000 : f32
      %84 = vector.broadcast %cst_58 : f32 to vector<2x8x1xf32>
      %c0_59 = arith.constant 0 : index
      %c0_60 = arith.constant 0 : index
      %c0_61 = arith.constant 0 : index
      %85 = vector.load %arg8[%c0_59, %c0_60, %c0_61] : memref<2x8x1xf32, #tpu.memory_space<vmem>>, vector<2x8x1xf32>
      tpu.vector_store %arg8[%c0_59, %c0_60, %c0_61], %84 {strides = array<i32>} : memref<2x8x1xf32, #tpu.memory_space<vmem>>, vector<2x8x1xf32>,
      %cst_62 = arith.constant 0.000000e+00 : f32
      %86 = vector.broadcast %cst_62 : f32 to vector<2x8x1xf32>
      %c0_63 = arith.constant 0 : index
      %c0_64 = arith.constant 0 : index
      %c0_65 = arith.constant 0 : index
      %87 = vector.load %arg9[%c0_63, %c0_64, %c0_65] : memref<2x8x1xf32, #tpu.memory_space<vmem>>, vector<2x8x1xf32>
      tpu.vector_store %arg9[%c0_63, %c0_64, %c0_65], %86 {strides = array<i32>} : memref<2x8x1xf32, #tpu.memory_space<vmem>>, vector<2x8x1xf32>,
      %cst_66 = arith.constant 0.000000e+00 : f32
      %88 = vector.broadcast %cst_66 : f32 to vector<2x8x16xf32>
      %c0_67 = arith.constant 0 : index
      %c0_68 = arith.constant 0 : index
      %c0_69 = arith.constant 0 : index
      %89 = vector.load %arg10[%c0_67, %c0_68, %c0_69] : memref<2x8x16xf32, #tpu.memory_space<vmem>>, vector<2x8x16xf32>
      tpu.vector_store %arg10[%c0_67, %c0_68, %c0_69], %88 {strides = array<i32>} : memref<2x8x16xf32, #tpu.memory_space<vmem>>, vector<2x8x16xf32>,
    } else {
    }
    %c0 = arith.constant 0 : index
    %c0_1 = arith.constant 0 : index
    %c0_2 = arith.constant 0 : index
    %3 = vector.load %arg6[%c0, %c0_1, %c0_2] : memref<1x1x8xf32, #tpu.memory_space<vmem>>, vector<1x1x8xf32>
    %4 = vector.shape_cast %3 : vector<1x1x8xf32> to vector<1x8xf32>
    %c0_3 = arith.constant 0 : index
    %c0_4 = arith.constant 0 : index
    %5 = vector.load %arg3[%c0_3, %c0_4] : memref<8x32xbf16, #tpu.memory_space<vmem>>, vector<8x16xbf16>
    %c0_5 = arith.constant 0 : index
    %c0_6 = arith.constant 0 : index
    %6 = vector.load %arg4[%c0_5, %c0_6] : memref<8x32xbf16, #tpu.memory_space<vmem>>, vector<8x16xbf16>
    %cst = arith.constant dense<0.000000e+00> : vector<8x8xf32>
    %7 = tpu.matmul %5, %6, %cst {dimension_numbers = #tpu.dot_dimension_numbers<[1], [1], [0], [0], [0, 0, 1, 0], [], []>} : vector<8x16xbf16>, vector<8x16xbf16>, vector<8x8xf32> -> vector<8x8xf32>
    %8 = vector.broadcast %4 : vector<1x8xf32> to vector<8x8xf32>
    %9 = arith.addf %7, %8 : vector<8x8xf32>
    %c0_7 = arith.constant 0 : index
    %c0_8 = arith.constant 0 : index
    %c0_9 = arith.constant 0 : index
    %10 = vector.load %arg8[%c0_7, %c0_8, %c0_9] : memref<2x8x1xf32, #tpu.memory_space<vmem>>, vector<1x8x1xf32>
    %11 = vector.shape_cast %10 : vector<1x8x1xf32> to vector<8x1xf32>
    %cst_10 = arith.constant dense<0xFF800000> : vector<8xf32>
    %12 = vector.multi_reduction <maximumf>, %9, %cst_10 [1] : vector<8x8xf32> to vector<8xf32>
    %13 = vector.shape_cast %12 : vector<8xf32> to vector<8x1xf32>
    %14 = arith.maximumf %11, %13 : vector<8x1xf32>
    %15 = arith.subf %11, %14 : vector<8x1xf32>
    %16 = math.exp %15 : vector<8x1xf32>
    %17 = vector.broadcast %14 : vector<8x1xf32> to vector<8x8xf32>
    %18 = arith.subf %9, %17 : vector<8x8xf32>
    %19 = math.exp %18 : vector<8x8xf32>
    %c0_11 = arith.constant 0 : index
    %c0_12 = arith.constant 0 : index
    %c0_13 = arith.constant 0 : index
    %20 = vector.load %arg9[%c0_11, %c0_12, %c0_13] : memref<2x8x1xf32, #tpu.memory_space<vmem>>, vector<1x8x1xf32>
    %21 = vector.shape_cast %20 : vector<1x8x1xf32> to vector<8x1xf32>
    %22 = arith.mulf %16, %21 : vector<8x1xf32>
    %cst_14 = arith.constant dense<0.000000e+00> : vector<8xf32>
    %23 = vector.multi_reduction <add>, %19, %cst_14 [1] : vector<8x8xf32> to vector<8xf32>
    %24 = vector.shape_cast %23 : vector<8xf32> to vector<8x1xf32>
    %25 = arith.addf %22, %24 : vector<8x1xf32>
    %c0_15 = arith.constant 0 : index
    %c0_16 = arith.constant 0 : index
    %c0_17 = arith.constant 0 : index
    %26 = vector.load %arg9[%c0_15, %c0_16, %c0_17] : memref<2x8x1xf32, #tpu.memory_space<vmem>>, vector<1x8x1xf32>
    %27 = vector.shape_cast %26 : vector<1x8x1xf32> to vector<8x1xf32>
    %28 = vector.shape_cast %25 : vector<8x1xf32> to vector<1x8x1xf32>
    tpu.vector_store %arg9[%c0_15, %c0_16, %c0_17], %28 {strides = array<i32>} : memref<2x8x1xf32, #tpu.memory_space<vmem>>, vector<1x8x1xf32>,
    %29 = arith.truncf %19 : vector<8x8xf32> to vector<8x8xbf16>
    %c0_18 = arith.constant 0 : index
    %c0_19 = arith.constant 0 : index
    %30 = vector.load %arg5[%c0_18, %c0_19] : memref<8x32xbf16, #tpu.memory_space<vmem>>, vector<8x16xbf16>
    %cst_20 = arith.constant dense<0.000000e+00> : vector<8x16xf32>
    %31 = tpu.matmul %29, %30, %cst_20 {dimension_numbers = #tpu.dot_dimension_numbers<[1], [0], [0], [1], [0, 0, 1, 1], [], []>} : vector<8x8xbf16>, vector<8x16xbf16>, vector<8x16xf32> -> vector<8x16xf32>
    %c0_21 = arith.constant 0 : index
    %c0_22 = arith.constant 0 : index
    %c0_23 = arith.constant 0 : index
    %32 = vector.load %arg10[%c0_21, %c0_22, %c0_23] : memref<2x8x16xf32, #tpu.memory_space<vmem>>, vector<1x8x16xf32>
    %33 = vector.shape_cast %32 : vector<1x8x16xf32> to vector<8x16xf32>
    %34 = vector.broadcast %16 : vector<8x1xf32> to vector<8x16xf32>
    %35 = arith.mulf %34, %33 : vector<8x16xf32>
    %36 = arith.addf %35, %31 : vector<8x16xf32>
    %c0_24 = arith.constant 0 : index
    %c0_25 = arith.constant 0 : index
    %c0_26 = arith.constant 0 : index
    %37 = vector.load %arg10[%c0_24, %c0_25, %c0_26] : memref<2x8x16xf32, #tpu.memory_space<vmem>>, vector<1x8x16xf32>
    %38 = vector.shape_cast %37 : vector<1x8x16xf32> to vector<8x16xf32>
    %39 = vector.shape_cast %36 : vector<8x16xf32> to vector<1x8x16xf32>
    tpu.vector_store %arg10[%c0_24, %c0_25, %c0_26], %39 {strides = array<i32>} : memref<2x8x16xf32, #tpu.memory_space<vmem>>, vector<1x8x16xf32>,
    %c0_27 = arith.constant 0 : index
    %c0_28 = arith.constant 0 : index
    %c0_29 = arith.constant 0 : index
    %40 = vector.load %arg8[%c0_27, %c0_28, %c0_29] : memref<2x8x1xf32, #tpu.memory_space<vmem>>, vector<1x8x1xf32>
    %41 = vector.shape_cast %40 : vector<1x8x1xf32> to vector<8x1xf32>
    %42 = vector.shape_cast %14 : vector<8x1xf32> to vector<1x8x1xf32>
    tpu.vector_store %arg8[%c0_27, %c0_28, %c0_29], %42 {strides = array<i32>} : memref<2x8x1xf32, #tpu.memory_space<vmem>>, vector<1x8x1xf32>,
    %c0_30 = arith.constant 0 : index
    %c16 = arith.constant 16 : index
    %43 = vector.load %arg3[%c0_30, %c16] : memref<8x32xbf16, #tpu.memory_space<vmem>>, vector<8x16xbf16>
    %c0_31 = arith.constant 0 : index
    %c16_32 = arith.constant 16 : index
    %44 = vector.load %arg4[%c0_31, %c16_32] : memref<8x32xbf16, #tpu.memory_space<vmem>>, vector<8x16xbf16>
    %cst_33 = arith.constant dense<0.000000e+00> : vector<8x8xf32>
    %45 = tpu.matmul %43, %44, %cst_33 {dimension_numbers = #tpu.dot_dimension_numbers<[1], [1], [0], [0], [0, 0, 1, 0], [], []>} : vector<8x16xbf16>, vector<8x16xbf16>, vector<8x8xf32> -> vector<8x8xf32>
    %46 = vector.broadcast %4 : vector<1x8xf32> to vector<8x8xf32>
    %47 = arith.addf %45, %46 : vector<8x8xf32>
    %c1 = arith.constant 1 : index
    %c0_34 = arith.constant 0 : index
    %c0_35 = arith.constant 0 : index
    %48 = vector.load %arg8[%c1, %c0_34, %c0_35] : memref<2x8x1xf32, #tpu.memory_space<vmem>>, vector<1x8x1xf32>
    %49 = vector.shape_cast %48 : vector<1x8x1xf32> to vector<8x1xf32>
    %cst_36 = arith.constant dense<0xFF800000> : vector<8xf32>
    %50 = vector.multi_reduction <maximumf>, %47, %cst_36 [1] : vector<8x8xf32> to vector<8xf32>
    %51 = vector.shape_cast %50 : vector<8xf32> to vector<8x1xf32>
    %52 = arith.maximumf %49, %51 : vector<8x1xf32>
    %53 = arith.subf %49, %52 : vector<8x1xf32>
    %54 = math.exp %53 : vector<8x1xf32>
    %55 = vector.broadcast %52 : vector<8x1xf32> to vector<8x8xf32>
    %56 = arith.subf %47, %55 : vector<8x8xf32>
    %57 = math.exp %56 : vector<8x8xf32>
    %c1_37 = arith.constant 1 : index
    %c0_38 = arith.constant 0 : index
    %c0_39 = arith.constant 0 : index
    %58 = vector.load %arg9[%c1_37, %c0_38, %c0_39] : memref<2x8x1xf32, #tpu.memory_space<vmem>>, vector<1x8x1xf32>
    %59 = vector.shape_cast %58 : vector<1x8x1xf32> to vector<8x1xf32>
    %60 = arith.mulf %54, %59 : vector<8x1xf32>
    %cst_40 = arith.constant dense<0.000000e+00> : vector<8xf32>
    %61 = vector.multi_reduction <add>, %57, %cst_40 [1] : vector<8x8xf32> to vector<8xf32>
    %62 = vector.shape_cast %61 : vector<8xf32> to vector<8x1xf32>
    %63 = arith.addf %60, %62 : vector<8x1xf32>
    %c1_41 = arith.constant 1 : index
    %c0_42 = arith.constant 0 : index
    %c0_43 = arith.constant 0 : index
    %64 = vector.load %arg9[%c1_41, %c0_42, %c0_43] : memref<2x8x1xf32, #tpu.memory_space<vmem>>, vector<1x8x1xf32>
    %65 = vector.shape_cast %64 : vector<1x8x1xf32> to vector<8x1xf32>
    %66 = vector.shape_cast %63 : vector<8x1xf32> to vector<1x8x1xf32>
    tpu.vector_store %arg9[%c1_41, %c0_42, %c0_43], %66 {strides = array<i32>} : memref<2x8x1xf32, #tpu.memory_space<vmem>>, vector<1x8x1xf32>,
    %67 = arith.truncf %57 : vector<8x8xf32> to vector<8x8xbf16>
    %c0_44 = arith.constant 0 : index
    %c16_45 = arith.constant 16 : index
    %68 = vector.load %arg5[%c0_44, %c16_45] : memref<8x32xbf16, #tpu.memory_space<vmem>>, vector<8x16xbf16>
    %cst_46 = arith.constant dense<0.000000e+00> : vector<8x16xf32>
    %69 = tpu.matmul %67, %68, %cst_46 {dimension_numbers = #tpu.dot_dimension_numbers<[1], [0], [0], [1], [0, 0, 1, 1], [], []>} : vector<8x8xbf16>, vector<8x16xbf16>, vector<8x16xf32> -> vector<8x16xf32>
    %c1_47 = arith.constant 1 : index
    %c0_48 = arith.constant 0 : index
    %c0_49 = arith.constant 0 : index
    %70 = vector.load %arg10[%c1_47, %c0_48, %c0_49] : memref<2x8x16xf32, #tpu.memory_space<vmem>>, vector<1x8x16xf32>
    %71 = vector.shape_cast %70 : vector<1x8x16xf32> to vector<8x16xf32>
    %72 = vector.broadcast %54 : vector<8x1xf32> to vector<8x16xf32>
    %73 = arith.mulf %72, %71 : vector<8x16xf32>
    %74 = arith.addf %73, %69 : vector<8x16xf32>
    %c1_50 = arith.constant 1 : index
    %c0_51 = arith.constant 0 : index
    %c0_52 = arith.constant 0 : index
    %75 = vector.load %arg10[%c1_50, %c0_51, %c0_52] : memref<2x8x16xf32, #tpu.memory_space<vmem>>, vector<1x8x16xf32>
    %76 = vector.shape_cast %75 : vector<1x8x16xf32> to vector<8x16xf32>
    %77 = vector.shape_cast %74 : vector<8x16xf32> to vector<1x8x16xf32>
    tpu.vector_store %arg10[%c1_50, %c0_51, %c0_52], %77 {strides = array<i32>} : memref<2x8x16xf32, #tpu.memory_space<vmem>>, vector<1x8x16xf32>,
    %c1_53 = arith.constant 1 : index
    %c0_54 = arith.constant 0 : index
    %c0_55 = arith.constant 0 : index
    %78 = vector.load %arg8[%c1_53, %c0_54, %c0_55] : memref<2x8x1xf32, #tpu.memory_space<vmem>>, vector<1x8x1xf32>
    %79 = vector.shape_cast %78 : vector<1x8x1xf32> to vector<8x1xf32>
    %80 = vector.shape_cast %52 : vector<8x1xf32> to vector<1x8x1xf32>
    tpu.vector_store %arg8[%c1_53, %c0_54, %c0_55], %80 {strides = array<i32>} : memref<2x8x1xf32, #tpu.memory_space<vmem>>, vector<1x8x1xf32>,
    %c0_i32_56 = arith.constant 0 : i32
    %81 = arith.cmpi eq, %arg2, %c0_i32_56 : i32
    %82 = arith.extui %81 : i1 to i32
    %c0_i32_57 = arith.constant 0 : i32
    %83 = arith.cmpi ne, %82, %c0_i32_57 : i32
    scf.if %83 {
      %c0_58 = arith.constant 0 : index
      %c0_59 = arith.constant 0 : index
      %c0_60 = arith.constant 0 : index
      %84 = vector.load %arg9[%c0_58, %c0_59, %c0_60] : memref<2x8x1xf32, #tpu.memory_space<vmem>>, vector<1x8x1xf32>
      %85 = vector.shape_cast %84 : vector<1x8x1xf32> to vector<8x1xf32>
      %86 = tpu.reciprocal %85 {approx = true} : vector<8x1xf32> -> vector<8x1xf32>
      %c0_61 = arith.constant 0 : index
      %c0_62 = arith.constant 0 : index
      %c0_63 = arith.constant 0 : index
      %87 = vector.load %arg10[%c0_61, %c0_62, %c0_63] : memref<2x8x16xf32, #tpu.memory_space<vmem>>, vector<1x8x16xf32>
      %88 = vector.shape_cast %87 : vector<1x8x16xf32> to vector<8x16xf32>
      %89 = vector.broadcast %86 : vector<8x1xf32> to vector<8x16xf32>
      %90 = arith.mulf %88, %89 : vector<8x16xf32>
      %91 = arith.truncf %90 : vector<8x16xf32> to vector<8x16xbf16>
      %c0_64 = arith.constant 0 : index
      %c0_65 = arith.constant 0 : index
      %92 = vector.load %arg7[%c0_64, %c0_65] : memref<8x32xbf16, #tpu.memory_space<vmem>>, vector<8x16xbf16>
      tpu.vector_store %arg7[%c0_64, %c0_65], %91 {strides = array<i32>} : memref<8x32xbf16, #tpu.memory_space<vmem>>, vector<8x16xbf16>,
      %c1_66 = arith.constant 1 : index
      %c0_67 = arith.constant 0 : index
      %c0_68 = arith.constant 0 : index
      %93 = vector.load %arg9[%c1_66, %c0_67, %c0_68] : memref<2x8x1xf32, #tpu.memory_space<vmem>>, vector<1x8x1xf32>
      %94 = vector.shape_cast %93 : vector<1x8x1xf32> to vector<8x1xf32>
      %95 = tpu.reciprocal %94 {approx = true} : vector<8x1xf32> -> vector<8x1xf32>
      %c1_69 = arith.constant 1 : index
      %c0_70 = arith.constant 0 : index
      %c0_71 = arith.constant 0 : index
      %96 = vector.load %arg10[%c1_69, %c0_70, %c0_71] : memref<2x8x16xf32, #tpu.memory_space<vmem>>, vector<1x8x16xf32>
      %97 = vector.shape_cast %96 : vector<1x8x16xf32> to vector<8x16xf32>
      %98 = vector.broadcast %95 : vector<8x1xf32> to vector<8x16xf32>
      %99 = arith.mulf %97, %98 : vector<8x16xf32>
      %100 = arith.truncf %99 : vector<8x16xf32> to vector<8x16xbf16>
      %c0_72 = arith.constant 0 : index
      %c16_73 = arith.constant 16 : index
      %101 = vector.load %arg7[%c0_72, %c16_73] : memref<8x32xbf16, #tpu.memory_space<vmem>>, vector<8x16xbf16>
      tpu.vector_store %arg7[%c0_72, %c16_73], %100 {strides = array<i32>} : memref<8x32xbf16, #tpu.memory_space<vmem>>, vector<8x16xbf16>,
    } else {
    }
    return
  }
  func.func @transform_0(%arg0: i32, %arg1: i32, %arg2: i32) -> (i32, i32) {
    %c1_i32 = arith.constant 1 : i32
    %0 = arith.muli %arg0, %c1_i32 : i32
    %1 = arith.addi %0, %arg1 : i32
    %c0_i32 = arith.constant 0 : i32
    %c0_i32_0 = arith.constant 0 : i32
    return %1, %c0_i32 : i32, i32
  }
  func.func @transform_1(%arg0: i32, %arg1: i32, %arg2: i32) -> (i32, i32) {
    %c1_i32 = arith.constant 1 : i32
    %0 = arith.muli %arg0, %c1_i32 : i32
    %1 = arith.addi %0, %arg2 : i32
    %c0_i32 = arith.constant 0 : i32
    %c0_i32_0 = arith.constant 0 : i32
    return %1, %c0_i32 : i32, i32
  }
  func.func @transform_2(%arg0: i32, %arg1: i32, %arg2: i32) -> (i32, i32) {
    %c1_i32 = arith.constant 1 : i32
    %0 = arith.muli %arg0, %c1_i32 : i32
    %1 = arith.addi %0, %arg2 : i32
    %c0_i32 = arith.constant 0 : i32
    %c0_i32_0 = arith.constant 0 : i32
    return %1, %c0_i32 : i32, i32
  }
  func.func @transform_3(%arg0: i32, %arg1: i32, %arg2: i32) -> (i32, i32, i32) {
    %c0_i32 = arith.constant 0 : i32
    %c0_i32_0 = arith.constant 0 : i32
    return %arg0, %c0_i32, %arg2 : i32, i32, i32
  }
  func.func @transform_4(%arg0: i32, %arg1: i32, %arg2: i32) -> (i32, i32) {
    %c1_i32 = arith.constant 1 : i32
    %0 = arith.muli %arg0, %c1_i32 : i32
    %1 = arith.addi %0, %arg1 : i32
    %c0_i32 = arith.constant 0 : i32
    %c0_i32_0 = arith.constant 0 : i32
    return %1, %c0_i32 : i32, i32
  }
}

module attributes {stable_mosaic.version = 11 : i64} {
  func.func @_linear_res_ln_kernel(%arg0: i32, %arg1: i32, %arg2: memref<16x32xbf16, #tpu.memory_space<vmem>>, %arg3: memref<32x32xbf16, #tpu.memory_space<vmem>>, %arg4: memref<1x32xf32, #tpu.memory_space<vmem>>, %arg5: memref<16x32xbf16, #tpu.memory_space<vmem>>, %arg6: memref<1x32xf32, #tpu.memory_space<vmem>>, %arg7: memref<1x32xf32, #tpu.memory_space<vmem>>, %arg8: memref<16x32xbf16, #tpu.memory_space<vmem>>, %arg9: memref<16x32xf32, #tpu.memory_space<vmem>>) attributes {dimension_semantics = [#tpu.dimension_semantics<parallel>, #tpu.dimension_semantics<arbitrary>], iteration_bounds = array<i64: 1, 1>, scalar_prefetch = 0 : i64, scratch_operands = 1 : i64, tpu.core_type = #tpu.core_type<tc>, window_params = [{transform_indices = @transform_0, window_bounds = array<i64: 16, 32>}, {transform_indices = @transform_1, window_bounds = array<i64: 32, 32>}, {pipeline_mode = #tpu.pipeline_mode<synchronous>, transform_indices = @transform_2, window_bounds = array<i64: 1, 32>}, {transform_indices = @transform_3, window_bounds = array<i64: 16, 32>}, {pipeline_mode = #tpu.pipeline_mode<synchronous>, transform_indices = @transform_4, window_bounds = array<i64: 1, 32>}, {pipeline_mode = #tpu.pipeline_mode<synchronous>, transform_indices = @transform_5, window_bounds = array<i64: 1, 32>}, {transform_indices = @transform_6, window_bounds = array<i64: 16, 32>}]} {
    %c0_i32 = arith.constant 0 : i32
    %0 = arith.cmpi eq, %arg1, %c0_i32 : i32
    %1 = arith.extui %0 : i1 to i32
    %c0_i32_0 = arith.constant 0 : i32
    %2 = arith.cmpi ne, %1, %c0_i32_0 : i32
    scf.if %2 {
      %cst_10 = arith.constant 0.000000e+00 : f32
      %12 = vector.broadcast %cst_10 : f32 to vector<16x32xf32>
      %c0_11 = arith.constant 0 : index
      %c0_12 = arith.constant 0 : index
      %13 = vector.load %arg9[%c0_11, %c0_12] : memref<16x32xf32, #tpu.memory_space<vmem>>, vector<16x32xf32>
      tpu.vector_store %arg9[%c0_11, %c0_12], %12 {strides = array<i32>} : memref<16x32xf32, #tpu.memory_space<vmem>>, vector<16x32xf32>,
    } else {
    }
    %c0 = arith.constant 0 : index
    %c0_1 = arith.constant 0 : index
    %3 = vector.load %arg9[%c0, %c0_1] : memref<16x32xf32, #tpu.memory_space<vmem>>, vector<16x32xf32>
    %c0_2 = arith.constant 0 : index
    %c0_3 = arith.constant 0 : index
    %4 = vector.load %arg2[%c0_2, %c0_3] : memref<16x32xbf16, #tpu.memory_space<vmem>>, vector<16x32xbf16>
    %c0_4 = arith.constant 0 : index
    %c0_5 = arith.constant 0 : index
    %5 = vector.load %arg3[%c0_4, %c0_5] : memref<32x32xbf16, #tpu.memory_space<vmem>>, vector<32x32xbf16>
    %cst = arith.constant dense<0.000000e+00> : vector<16x32xf32>
    %6 = tpu.matmul %4, %5, %cst {dimension_numbers = #tpu.dot_dimension_numbers<[1], [0], [0], [1], [0, 0, 1, 1], [], []>} : vector<16x32xbf16>, vector<32x32xbf16>, vector<16x32xf32> -> vector<16x32xf32>
    %7 = arith.addf %3, %6 : vector<16x32xf32>
    %c0_6 = arith.constant 0 : index
    %c0_7 = arith.constant 0 : index
    %8 = vector.load %arg9[%c0_6, %c0_7] : memref<16x32xf32, #tpu.memory_space<vmem>>, vector<16x32xf32>
    tpu.vector_store %arg9[%c0_6, %c0_7], %7 {strides = array<i32>} : memref<16x32xf32, #tpu.memory_space<vmem>>, vector<16x32xf32>,
    %c0_i32_8 = arith.constant 0 : i32
    %9 = arith.cmpi eq, %arg1, %c0_i32_8 : i32
    %10 = arith.extui %9 : i1 to i32
    %c0_i32_9 = arith.constant 0 : i32
    %11 = arith.cmpi ne, %10, %c0_i32_9 : i32
    scf.if %11 {
      %c0_10 = arith.constant 0 : index
      %c0_11 = arith.constant 0 : index
      %12 = vector.load %arg9[%c0_10, %c0_11] : memref<16x32xf32, #tpu.memory_space<vmem>>, vector<16x32xf32>
      %c0_12 = arith.constant 0 : index
      %c0_13 = arith.constant 0 : index
      %13 = vector.load %arg4[%c0_12, %c0_13] : memref<1x32xf32, #tpu.memory_space<vmem>>, vector<1x32xf32>
      %14 = vector.broadcast %13 : vector<1x32xf32> to vector<16x32xf32>
      %15 = arith.addf %12, %14 : vector<16x32xf32>
      %c0_14 = arith.constant 0 : index
      %c0_15 = arith.constant 0 : index
      %16 = vector.load %arg5[%c0_14, %c0_15] : memref<16x32xbf16, #tpu.memory_space<vmem>>, vector<16x32xbf16>
      %17 = arith.extf %16 : vector<16x32xbf16> to vector<16x32xf32>
      %18 = arith.addf %15, %17 : vector<16x32xf32>
      %cst_16 = arith.constant dense<0.000000e+00> : vector<16xf32>
      %19 = vector.multi_reduction <add>, %18, %cst_16 [1] : vector<16x32xf32> to vector<16xf32>
      %20 = vector.shape_cast %19 : vector<16xf32> to vector<16x1xf32>
      %cst_17 = arith.constant 3.200000e+01 : f32
      %21 = vector.broadcast %cst_17 : f32 to vector<16x1xf32>
      %22 = arith.divf %20, %21 : vector<16x1xf32>
      %23 = arith.mulf %18, %18 : vector<16x32xf32>
      %cst_18 = arith.constant dense<0.000000e+00> : vector<16xf32>
      %24 = vector.multi_reduction <add>, %23, %cst_18 [1] : vector<16x32xf32> to vector<16xf32>
      %25 = vector.shape_cast %24 : vector<16xf32> to vector<16x1xf32>
      %cst_19 = arith.constant 3.200000e+01 : f32
      %26 = vector.broadcast %cst_19 : f32 to vector<16x1xf32>
      %27 = arith.divf %25, %26 : vector<16x1xf32>
      %28 = arith.mulf %22, %22 : vector<16x1xf32>
      %29 = arith.subf %27, %28 : vector<16x1xf32>
      %cst_20 = arith.constant 0.000000e+00 : f32
      %30 = vector.broadcast %cst_20 : f32 to vector<16x1xf32>
      %31 = arith.maximumf %29, %30 : vector<16x1xf32>
      %32 = vector.broadcast %22 : vector<16x1xf32> to vector<16x32xf32>
      %33 = arith.subf %18, %32 : vector<16x32xf32>
      %cst_21 = arith.constant 9.99999996E-13 : f32
      %34 = vector.broadcast %cst_21 : f32 to vector<16x1xf32>
      %35 = arith.addf %31, %34 : vector<16x1xf32>
      %36 = math.rsqrt %35 : vector<16x1xf32>
      %37 = vector.broadcast %36 : vector<16x1xf32> to vector<16x32xf32>
      %38 = arith.mulf %33, %37 : vector<16x32xf32>
      %c0_22 = arith.constant 0 : index
      %c0_23 = arith.constant 0 : index
      %39 = vector.load %arg6[%c0_22, %c0_23] : memref<1x32xf32, #tpu.memory_space<vmem>>, vector<1x32xf32>
      %40 = vector.broadcast %39 : vector<1x32xf32> to vector<16x32xf32>
      %41 = arith.mulf %38, %40 : vector<16x32xf32>
      %c0_24 = arith.constant 0 : index
      %c0_25 = arith.constant 0 : index
      %42 = vector.load %arg7[%c0_24, %c0_25] : memref<1x32xf32, #tpu.memory_space<vmem>>, vector<1x32xf32>
      %43 = vector.broadcast %42 : vector<1x32xf32> to vector<16x32xf32>
      %44 = arith.addf %41, %43 : vector<16x32xf32>
      %45 = arith.truncf %44 : vector<16x32xf32> to vector<16x32xbf16>
      %c0_26 = arith.constant 0 : index
      %c0_27 = arith.constant 0 : index
      %46 = vector.load %arg8[%c0_26, %c0_27] : memref<16x32xbf16, #tpu.memory_space<vmem>>, vector<16x32xbf16>
      tpu.vector_store %arg8[%c0_26, %c0_27], %45 {strides = array<i32>} : memref<16x32xbf16, #tpu.memory_space<vmem>>, vector<16x32xbf16>,
    } else {
    }
    return
  }
  func.func @transform_0(%arg0: i32, %arg1: i32) -> (i32, i32) {
    %c0_i32 = arith.constant 0 : i32
    return %arg0, %arg1 : i32, i32
  }
  func.func @transform_1(%arg0: i32, %arg1: i32) -> (i32, i32) {
    %c0_i32 = arith.constant 0 : i32
    %c0_i32_0 = arith.constant 0 : i32
    return %arg1, %c0_i32 : i32, i32
  }
  func.func @transform_2(%arg0: i32, %arg1: i32) -> (i32, i32) {
    %c0_i32 = arith.constant 0 : i32
    %c0_i32_0 = arith.constant 0 : i32
    %c0_i32_1 = arith.constant 0 : i32
    return %c0_i32, %c0_i32_0 : i32, i32
  }
  func.func @transform_3(%arg0: i32, %arg1: i32) -> (i32, i32) {
    %c0_i32 = arith.constant 0 : i32
    %c0_i32_0 = arith.constant 0 : i32
    return %arg0, %c0_i32 : i32, i32
  }
  func.func @transform_4(%arg0: i32, %arg1: i32) -> (i32, i32) {
    %c0_i32 = arith.constant 0 : i32
    %c0_i32_0 = arith.constant 0 : i32
    %c0_i32_1 = arith.constant 0 : i32
    return %c0_i32, %c0_i32_0 : i32, i32
  }
  func.func @transform_5(%arg0: i32, %arg1: i32) -> (i32, i32) {
    %c0_i32 = arith.constant 0 : i32
    %c0_i32_0 = arith.constant 0 : i32
    %c0_i32_1 = arith.constant 0 : i32
    return %c0_i32, %c0_i32_0 : i32, i32
  }
  func.func @transform_6(%arg0: i32, %arg1: i32) -> (i32, i32) {
    %c0_i32 = arith.constant 0 : i32
    %c0_i32_0 = arith.constant 0 : i32
    return %arg0, %c0_i32 : i32, i32
  }
}

module attributes {stable_mosaic.version = 11 : i64} {
  func.func @_linear_kernel(%arg0: i32, %arg1: i32, %arg2: i32, %arg3: memref<16x32xbf16, #tpu.memory_space<vmem>>, %arg4: memref<32x32xbf16, #tpu.memory_space<vmem>>, %arg5: memref<1x32xf32, #tpu.memory_space<vmem>>, %arg6: memref<16x32xbf16, #tpu.memory_space<vmem>>, %arg7: memref<16x32xf32, #tpu.memory_space<vmem>>) attributes {dimension_semantics = [#tpu.dimension_semantics<parallel>, #tpu.dimension_semantics<parallel>, #tpu.dimension_semantics<arbitrary>], iteration_bounds = array<i64: 1, 1, 1>, scalar_prefetch = 0 : i64, scratch_operands = 1 : i64, tpu.core_type = #tpu.core_type<tc>, window_params = [{transform_indices = @transform_0, window_bounds = array<i64: 16, 32>}, {transform_indices = @transform_1, window_bounds = array<i64: 32, 32>}, {transform_indices = @transform_2, window_bounds = array<i64: 1, 32>}, {transform_indices = @transform_3, window_bounds = array<i64: 16, 32>}]} {
    %c0_i32 = arith.constant 0 : i32
    %0 = arith.cmpi eq, %arg2, %c0_i32 : i32
    %1 = arith.extui %0 : i1 to i32
    %c0_i32_0 = arith.constant 0 : i32
    %2 = arith.cmpi ne, %1, %c0_i32_0 : i32
    scf.if %2 {
      %cst_10 = arith.constant 0.000000e+00 : f32
      %12 = vector.broadcast %cst_10 : f32 to vector<16x32xf32>
      %c0_11 = arith.constant 0 : index
      %c0_12 = arith.constant 0 : index
      %13 = vector.load %arg7[%c0_11, %c0_12] : memref<16x32xf32, #tpu.memory_space<vmem>>, vector<16x32xf32>
      tpu.vector_store %arg7[%c0_11, %c0_12], %12 {strides = array<i32>} : memref<16x32xf32, #tpu.memory_space<vmem>>, vector<16x32xf32>,
    } else {
    }
    %c0 = arith.constant 0 : index
    %c0_1 = arith.constant 0 : index
    %3 = vector.load %arg7[%c0, %c0_1] : memref<16x32xf32, #tpu.memory_space<vmem>>, vector<16x32xf32>
    %c0_2 = arith.constant 0 : index
    %c0_3 = arith.constant 0 : index
    %4 = vector.load %arg3[%c0_2, %c0_3] : memref<16x32xbf16, #tpu.memory_space<vmem>>, vector<16x32xbf16>
    %c0_4 = arith.constant 0 : index
    %c0_5 = arith.constant 0 : index
    %5 = vector.load %arg4[%c0_4, %c0_5] : memref<32x32xbf16, #tpu.memory_space<vmem>>, vector<32x32xbf16>
    %cst = arith.constant dense<0.000000e+00> : vector<16x32xf32>
    %6 = tpu.matmul %4, %5, %cst {dimension_numbers = #tpu.dot_dimension_numbers<[1], [0], [0], [1], [0, 0, 1, 1], [], []>} : vector<16x32xbf16>, vector<32x32xbf16>, vector<16x32xf32> -> vector<16x32xf32>
    %7 = arith.addf %3, %6 : vector<16x32xf32>
    %c0_6 = arith.constant 0 : index
    %c0_7 = arith.constant 0 : index
    %8 = vector.load %arg7[%c0_6, %c0_7] : memref<16x32xf32, #tpu.memory_space<vmem>>, vector<16x32xf32>
    tpu.vector_store %arg7[%c0_6, %c0_7], %7 {strides = array<i32>} : memref<16x32xf32, #tpu.memory_space<vmem>>, vector<16x32xf32>,
    %c0_i32_8 = arith.constant 0 : i32
    %9 = arith.cmpi eq, %arg2, %c0_i32_8 : i32
    %10 = arith.extui %9 : i1 to i32
    %c0_i32_9 = arith.constant 0 : i32
    %11 = arith.cmpi ne, %10, %c0_i32_9 : i32
    scf.if %11 {
      %c0_10 = arith.constant 0 : index
      %c0_11 = arith.constant 0 : index
      %12 = vector.load %arg7[%c0_10, %c0_11] : memref<16x32xf32, #tpu.memory_space<vmem>>, vector<16x32xf32>
      %c0_12 = arith.constant 0 : index
      %c0_13 = arith.constant 0 : index
      %13 = vector.load %arg5[%c0_12, %c0_13] : memref<1x32xf32, #tpu.memory_space<vmem>>, vector<1x32xf32>
      %14 = vector.broadcast %13 : vector<1x32xf32> to vector<16x32xf32>
      %15 = arith.addf %12, %14 : vector<16x32xf32>
      %16 = arith.truncf %15 : vector<16x32xf32> to vector<16x32xbf16>
      %c0_14 = arith.constant 0 : index
      %c0_15 = arith.constant 0 : index
      %17 = vector.load %arg6[%c0_14, %c0_15] : memref<16x32xbf16, #tpu.memory_space<vmem>>, vector<16x32xbf16>
      tpu.vector_store %arg6[%c0_14, %c0_15], %16 {strides = array<i32>} : memref<16x32xbf16, #tpu.memory_space<vmem>>, vector<16x32xbf16>,
    } else {
    }
    return
  }
  func.func @transform_0(%arg0: i32, %arg1: i32, %arg2: i32) -> (i32, i32) {
    %c0_i32 = arith.constant 0 : i32
    return %arg0, %arg2 : i32, i32
  }
  func.func @transform_1(%arg0: i32, %arg1: i32, %arg2: i32) -> (i32, i32) {
    %c0_i32 = arith.constant 0 : i32
    return %arg2, %arg1 : i32, i32
  }
  func.func @transform_2(%arg0: i32, %arg1: i32, %arg2: i32) -> (i32, i32) {
    %c0_i32 = arith.constant 0 : i32
    %c0_i32_0 = arith.constant 0 : i32
    return %c0_i32, %arg1 : i32, i32
  }
  func.func @transform_3(%arg0: i32, %arg1: i32, %arg2: i32) -> (i32, i32) {
    %c0_i32 = arith.constant 0 : i32
    return %arg0, %arg1 : i32, i32
  }
}

module attributes {stable_mosaic.version = 11 : i64} {
  func.func @_linear_kernel(%arg0: i32, %arg1: i32, %arg2: i32, %arg3: memref<16x32xbf16, #tpu.memory_space<vmem>>, %arg4: memref<32x64xbf16, #tpu.memory_space<vmem>>, %arg5: memref<1x64xf32, #tpu.memory_space<vmem>>, %arg6: memref<16x64xbf16, #tpu.memory_space<vmem>>, %arg7: memref<16x64xf32, #tpu.memory_space<vmem>>) attributes {dimension_semantics = [#tpu.dimension_semantics<parallel>, #tpu.dimension_semantics<parallel>, #tpu.dimension_semantics<arbitrary>], iteration_bounds = array<i64: 1, 1, 1>, scalar_prefetch = 0 : i64, scratch_operands = 1 : i64, tpu.core_type = #tpu.core_type<tc>, window_params = [{transform_indices = @transform_0, window_bounds = array<i64: 16, 32>}, {transform_indices = @transform_1, window_bounds = array<i64: 32, 64>}, {transform_indices = @transform_2, window_bounds = array<i64: 1, 64>}, {transform_indices = @transform_3, window_bounds = array<i64: 16, 64>}]} {
    %c0_i32 = arith.constant 0 : i32
    %0 = arith.cmpi eq, %arg2, %c0_i32 : i32
    %1 = arith.extui %0 : i1 to i32
    %c0_i32_0 = arith.constant 0 : i32
    %2 = arith.cmpi ne, %1, %c0_i32_0 : i32
    scf.if %2 {
      %cst_10 = arith.constant 0.000000e+00 : f32
      %12 = vector.broadcast %cst_10 : f32 to vector<16x64xf32>
      %c0_11 = arith.constant 0 : index
      %c0_12 = arith.constant 0 : index
      %13 = vector.load %arg7[%c0_11, %c0_12] : memref<16x64xf32, #tpu.memory_space<vmem>>, vector<16x64xf32>
      tpu.vector_store %arg7[%c0_11, %c0_12], %12 {strides = array<i32>} : memref<16x64xf32, #tpu.memory_space<vmem>>, vector<16x64xf32>,
    } else {
    }
    %c0 = arith.constant 0 : index
    %c0_1 = arith.constant 0 : index
    %3 = vector.load %arg7[%c0, %c0_1] : memref<16x64xf32, #tpu.memory_space<vmem>>, vector<16x64xf32>
    %c0_2 = arith.constant 0 : index
    %c0_3 = arith.constant 0 : index
    %4 = vector.load %arg3[%c0_2, %c0_3] : memref<16x32xbf16, #tpu.memory_space<vmem>>, vector<16x32xbf16>
    %c0_4 = arith.constant 0 : index
    %c0_5 = arith.constant 0 : index
    %5 = vector.load %arg4[%c0_4, %c0_5] : memref<32x64xbf16, #tpu.memory_space<vmem>>, vector<32x64xbf16>
    %cst = arith.constant dense<0.000000e+00> : vector<16x64xf32>
    %6 = tpu.matmul %4, %5, %cst {dimension_numbers = #tpu.dot_dimension_numbers<[1], [0], [0], [1], [0, 0, 1, 1], [], []>} : vector<16x32xbf16>, vector<32x64xbf16>, vector<16x64xf32> -> vector<16x64xf32>
    %7 = arith.addf %3, %6 : vector<16x64xf32>
    %c0_6 = arith.constant 0 : index
    %c0_7 = arith.constant 0 : index
    %8 = vector.load %arg7[%c0_6, %c0_7] : memref<16x64xf32, #tpu.memory_space<vmem>>, vector<16x64xf32>
    tpu.vector_store %arg7[%c0_6, %c0_7], %7 {strides = array<i32>} : memref<16x64xf32, #tpu.memory_space<vmem>>, vector<16x64xf32>,
    %c0_i32_8 = arith.constant 0 : i32
    %9 = arith.cmpi eq, %arg2, %c0_i32_8 : i32
    %10 = arith.extui %9 : i1 to i32
    %c0_i32_9 = arith.constant 0 : i32
    %11 = arith.cmpi ne, %10, %c0_i32_9 : i32
    scf.if %11 {
      %c0_10 = arith.constant 0 : index
      %c0_11 = arith.constant 0 : index
      %12 = vector.load %arg7[%c0_10, %c0_11] : memref<16x64xf32, #tpu.memory_space<vmem>>, vector<16x64xf32>
      %c0_12 = arith.constant 0 : index
      %c0_13 = arith.constant 0 : index
      %13 = vector.load %arg5[%c0_12, %c0_13] : memref<1x64xf32, #tpu.memory_space<vmem>>, vector<1x64xf32>
      %14 = vector.broadcast %13 : vector<1x64xf32> to vector<16x64xf32>
      %15 = arith.addf %12, %14 : vector<16x64xf32>
      %16 = arith.mulf %15, %15 : vector<16x64xf32>
      %17 = arith.mulf %15, %16 : vector<16x64xf32>
      %cst_14 = arith.constant 4.471500e-02 : f32
      %18 = vector.broadcast %cst_14 : f32 to vector<16x64xf32>
      %19 = arith.mulf %18, %17 : vector<16x64xf32>
      %20 = arith.addf %15, %19 : vector<16x64xf32>
      %cst_15 = arith.constant 0.797884583 : f32
      %21 = vector.broadcast %cst_15 : f32 to vector<16x64xf32>
      %22 = arith.mulf %21, %20 : vector<16x64xf32>
      %23 = math.tanh %22 : vector<16x64xf32>
      %cst_16 = arith.constant 1.000000e+00 : f32
      %24 = vector.broadcast %cst_16 : f32 to vector<16x64xf32>
      %25 = arith.addf %24, %23 : vector<16x64xf32>
      %cst_17 = arith.constant 5.000000e-01 : f32
      %26 = vector.broadcast %cst_17 : f32 to vector<16x64xf32>
      %27 = arith.mulf %26, %25 : vector<16x64xf32>
      %28 = arith.mulf %15, %27 : vector<16x64xf32>
      %29 = arith.truncf %28 : vector<16x64xf32> to vector<16x64xbf16>
      %c0_18 = arith.constant 0 : index
      %c0_19 = arith.constant 0 : index
      %30 = vector.load %arg6[%c0_18, %c0_19] : memref<16x64xbf16, #tpu.memory_space<vmem>>, vector<16x64xbf16>
      tpu.vector_store %arg6[%c0_18, %c0_19], %29 {strides = array<i32>} : memref<16x64xbf16, #tpu.memory_space<vmem>>, vector<16x64xbf16>,
    } else {
    }
    return
  }
  func.func @transform_0(%arg0: i32, %arg1: i32, %arg2: i32) -> (i32, i32) {
    %c0_i32 = arith.constant 0 : i32
    return %arg0, %arg2 : i32, i32
  }
  func.func @transform_1(%arg0: i32, %arg1: i32, %arg2: i32) -> (i32, i32) {
    %c0_i32 = arith.constant 0 : i32
    return %arg2, %arg1 : i32, i32
  }
  func.func @transform_2(%arg0: i32, %arg1: i32, %arg2: i32) -> (i32, i32) {
    %c0_i32 = arith.constant 0 : i32
    %c0_i32_0 = arith.constant 0 : i32
    return %c0_i32, %arg1 : i32, i32
  }
  func.func @transform_3(%arg0: i32, %arg1: i32, %arg2: i32) -> (i32, i32) {
    %c0_i32 = arith.constant 0 : i32
    return %arg0, %arg1 : i32, i32
  }
}

module attributes {stable_mosaic.version = 11 : i64} {
  func.func @_linear_res_ln_kernel(%arg0: i32, %arg1: i32, %arg2: memref<16x64xbf16, #tpu.memory_space<vmem>>, %arg3: memref<64x32xbf16, #tpu.memory_space<vmem>>, %arg4: memref<1x32xf32, #tpu.memory_space<vmem>>, %arg5: memref<16x32xbf16, #tpu.memory_space<vmem>>, %arg6: memref<1x32xf32, #tpu.memory_space<vmem>>, %arg7: memref<1x32xf32, #tpu.memory_space<vmem>>, %arg8: memref<16x32xbf16, #tpu.memory_space<vmem>>, %arg9: memref<16x32xf32, #tpu.memory_space<vmem>>) attributes {dimension_semantics = [#tpu.dimension_semantics<parallel>, #tpu.dimension_semantics<arbitrary>], iteration_bounds = array<i64: 1, 1>, scalar_prefetch = 0 : i64, scratch_operands = 1 : i64, tpu.core_type = #tpu.core_type<tc>, window_params = [{transform_indices = @transform_0, window_bounds = array<i64: 16, 64>}, {transform_indices = @transform_1, window_bounds = array<i64: 64, 32>}, {pipeline_mode = #tpu.pipeline_mode<synchronous>, transform_indices = @transform_2, window_bounds = array<i64: 1, 32>}, {transform_indices = @transform_3, window_bounds = array<i64: 16, 32>}, {pipeline_mode = #tpu.pipeline_mode<synchronous>, transform_indices = @transform_4, window_bounds = array<i64: 1, 32>}, {pipeline_mode = #tpu.pipeline_mode<synchronous>, transform_indices = @transform_5, window_bounds = array<i64: 1, 32>}, {transform_indices = @transform_6, window_bounds = array<i64: 16, 32>}]} {
    %c0_i32 = arith.constant 0 : i32
    %0 = arith.cmpi eq, %arg1, %c0_i32 : i32
    %1 = arith.extui %0 : i1 to i32
    %c0_i32_0 = arith.constant 0 : i32
    %2 = arith.cmpi ne, %1, %c0_i32_0 : i32
    scf.if %2 {
      %cst_10 = arith.constant 0.000000e+00 : f32
      %12 = vector.broadcast %cst_10 : f32 to vector<16x32xf32>
      %c0_11 = arith.constant 0 : index
      %c0_12 = arith.constant 0 : index
      %13 = vector.load %arg9[%c0_11, %c0_12] : memref<16x32xf32, #tpu.memory_space<vmem>>, vector<16x32xf32>
      tpu.vector_store %arg9[%c0_11, %c0_12], %12 {strides = array<i32>} : memref<16x32xf32, #tpu.memory_space<vmem>>, vector<16x32xf32>,
    } else {
    }
    %c0 = arith.constant 0 : index
    %c0_1 = arith.constant 0 : index
    %3 = vector.load %arg9[%c0, %c0_1] : memref<16x32xf32, #tpu.memory_space<vmem>>, vector<16x32xf32>
    %c0_2 = arith.constant 0 : index
    %c0_3 = arith.constant 0 : index
    %4 = vector.load %arg2[%c0_2, %c0_3] : memref<16x64xbf16, #tpu.memory_space<vmem>>, vector<16x64xbf16>
    %c0_4 = arith.constant 0 : index
    %c0_5 = arith.constant 0 : index
    %5 = vector.load %arg3[%c0_4, %c0_5] : memref<64x32xbf16, #tpu.memory_space<vmem>>, vector<64x32xbf16>
    %cst = arith.constant dense<0.000000e+00> : vector<16x32xf32>
    %6 = tpu.matmul %4, %5, %cst {dimension_numbers = #tpu.dot_dimension_numbers<[1], [0], [0], [1], [0, 0, 1, 1], [], []>} : vector<16x64xbf16>, vector<64x32xbf16>, vector<16x32xf32> -> vector<16x32xf32>
    %7 = arith.addf %3, %6 : vector<16x32xf32>
    %c0_6 = arith.constant 0 : index
    %c0_7 = arith.constant 0 : index
    %8 = vector.load %arg9[%c0_6, %c0_7] : memref<16x32xf32, #tpu.memory_space<vmem>>, vector<16x32xf32>
    tpu.vector_store %arg9[%c0_6, %c0_7], %7 {strides = array<i32>} : memref<16x32xf32, #tpu.memory_space<vmem>>, vector<16x32xf32>,
    %c0_i32_8 = arith.constant 0 : i32
    %9 = arith.cmpi eq, %arg1, %c0_i32_8 : i32
    %10 = arith.extui %9 : i1 to i32
    %c0_i32_9 = arith.constant 0 : i32
    %11 = arith.cmpi ne, %10, %c0_i32_9 : i32
    scf.if %11 {
      %c0_10 = arith.constant 0 : index
      %c0_11 = arith.constant 0 : index
      %12 = vector.load %arg9[%c0_10, %c0_11] : memref<16x32xf32, #tpu.memory_space<vmem>>, vector<16x32xf32>
      %c0_12 = arith.constant 0 : index
      %c0_13 = arith.constant 0 : index
      %13 = vector.load %arg4[%c0_12, %c0_13] : memref<1x32xf32, #tpu.memory_space<vmem>>, vector<1x32xf32>
      %14 = vector.broadcast %13 : vector<1x32xf32> to vector<16x32xf32>
      %15 = arith.addf %12, %14 : vector<16x32xf32>
      %c0_14 = arith.constant 0 : index
      %c0_15 = arith.constant 0 : index
      %16 = vector.load %arg5[%c0_14, %c0_15] : memref<16x32xbf16, #tpu.memory_space<vmem>>, vector<16x32xbf16>
      %17 = arith.extf %16 : vector<16x32xbf16> to vector<16x32xf32>
      %18 = arith.addf %15, %17 : vector<16x32xf32>
      %cst_16 = arith.constant dense<0.000000e+00> : vector<16xf32>
      %19 = vector.multi_reduction <add>, %18, %cst_16 [1] : vector<16x32xf32> to vector<16xf32>
      %20 = vector.shape_cast %19 : vector<16xf32> to vector<16x1xf32>
      %cst_17 = arith.constant 3.200000e+01 : f32
      %21 = vector.broadcast %cst_17 : f32 to vector<16x1xf32>
      %22 = arith.divf %20, %21 : vector<16x1xf32>
      %23 = arith.mulf %18, %18 : vector<16x32xf32>
      %cst_18 = arith.constant dense<0.000000e+00> : vector<16xf32>
      %24 = vector.multi_reduction <add>, %23, %cst_18 [1] : vector<16x32xf32> to vector<16xf32>
      %25 = vector.shape_cast %24 : vector<16xf32> to vector<16x1xf32>
      %cst_19 = arith.constant 3.200000e+01 : f32
      %26 = vector.broadcast %cst_19 : f32 to vector<16x1xf32>
      %27 = arith.divf %25, %26 : vector<16x1xf32>
      %28 = arith.mulf %22, %22 : vector<16x1xf32>
      %29 = arith.subf %27, %28 : vector<16x1xf32>
      %cst_20 = arith.constant 0.000000e+00 : f32
      %30 = vector.broadcast %cst_20 : f32 to vector<16x1xf32>
      %31 = arith.maximumf %29, %30 : vector<16x1xf32>
      %32 = vector.broadcast %22 : vector<16x1xf32> to vector<16x32xf32>
      %33 = arith.subf %18, %32 : vector<16x32xf32>
      %cst_21 = arith.constant 9.99999996E-13 : f32
      %34 = vector.broadcast %cst_21 : f32 to vector<16x1xf32>
      %35 = arith.addf %31, %34 : vector<16x1xf32>
      %36 = math.rsqrt %35 : vector<16x1xf32>
      %37 = vector.broadcast %36 : vector<16x1xf32> to vector<16x32xf32>
      %38 = arith.mulf %33, %37 : vector<16x32xf32>
      %c0_22 = arith.constant 0 : index
      %c0_23 = arith.constant 0 : index
      %39 = vector.load %arg6[%c0_22, %c0_23] : memref<1x32xf32, #tpu.memory_space<vmem>>, vector<1x32xf32>
      %40 = vector.broadcast %39 : vector<1x32xf32> to vector<16x32xf32>
      %41 = arith.mulf %38, %40 : vector<16x32xf32>
      %c0_24 = arith.constant 0 : index
      %c0_25 = arith.constant 0 : index
      %42 = vector.load %arg7[%c0_24, %c0_25] : memref<1x32xf32, #tpu.memory_space<vmem>>, vector<1x32xf32>
      %43 = vector.broadcast %42 : vector<1x32xf32> to vector<16x32xf32>
      %44 = arith.addf %41, %43 : vector<16x32xf32>
      %45 = arith.truncf %44 : vector<16x32xf32> to vector<16x32xbf16>
      %c0_26 = arith.constant 0 : index
      %c0_27 = arith.constant 0 : index
      %46 = vector.load %arg8[%c0_26, %c0_27] : memref<16x32xbf16, #tpu.memory_space<vmem>>, vector<16x32xbf16>
      tpu.vector_store %arg8[%c0_26, %c0_27], %45 {strides = array<i32>} : memref<16x32xbf16, #tpu.memory_space<vmem>>, vector<16x32xbf16>,
    } else {
    }
    return
  }
  func.func @transform_0(%arg0: i32, %arg1: i32) -> (i32, i32) {
    %c0_i32 = arith.constant 0 : i32
    return %arg0, %arg1 : i32, i32
  }
  func.func @transform_1(%arg0: i32, %arg1: i32) -> (i32, i32) {
    %c0_i32 = arith.constant 0 : i32
    %c0_i32_0 = arith.constant 0 : i32
    return %arg1, %c0_i32 : i32, i32
  }
  func.func @transform_2(%arg0: i32, %arg1: i32) -> (i32, i32) {
    %c0_i32 = arith.constant 0 : i32
    %c0_i32_0 = arith.constant 0 : i32
    %c0_i32_1 = arith.constant 0 : i32
    return %c0_i32, %c0_i32_0 : i32, i32
  }
  func.func @transform_3(%arg0: i32, %arg1: i32) -> (i32, i32) {
    %c0_i32 = arith.constant 0 : i32
    %c0_i32_0 = arith.constant 0 : i32
    return %arg0, %c0_i32 : i32, i32
  }
  func.func @transform_4(%arg0: i32, %arg1: i32) -> (i32, i32) {
    %c0_i32 = arith.constant 0 : i32
    %c0_i32_0 = arith.constant 0 : i32
    %c0_i32_1 = arith.constant 0 : i32
    return %c0_i32, %c0_i32_0 : i32, i32
  }
  func.func @transform_5(%arg0: i32, %arg1: i32) -> (i32, i32) {
    %c0_i32 = arith.constant 0 : i32
    %c0_i32_0 = arith.constant 0 : i32
    %c0_i32_1 = arith.constant 0 : i32
    return %c0_i32, %c0_i32_0 : i32, i32
  }
  func.func @transform_6(%arg0: i32, %arg1: i32) -> (i32, i32) {
    %c0_i32 = arith.constant 0 : i32
    %c0_i32_0 = arith.constant 0 : i32
    return %arg0, %c0_i32 : i32, i32
  }
}

module attributes {stable_mosaic.version = 11 : i64} {
  func.func @_cls_ce_kernel(%arg0: i32, %arg1: memref<16x32xbf16, #tpu.memory_space<vmem>>, %arg2: memref<32x2xbf16, #tpu.memory_space<vmem>>, %arg3: memref<1x2xf32, #tpu.memory_space<vmem>>, %arg4: memref<16x1xi32, #tpu.memory_space<vmem>>, %arg5: memref<16x2xf32, #tpu.memory_space<vmem>>, %arg6: memref<1x2xf32, #tpu.memory_space<smem>>) attributes {dimension_semantics = [#tpu.dimension_semantics<parallel>], iteration_bounds = array<i64: 1>, scalar_prefetch = 0 : i64, scratch_operands = 0 : i64, tpu.core_type = #tpu.core_type<tc>, window_params = [{transform_indices = @transform_0, window_bounds = array<i64: 16, 32>}, {pipeline_mode = #tpu.pipeline_mode<synchronous>, transform_indices = @transform_1, window_bounds = array<i64: 32, 2>}, {pipeline_mode = #tpu.pipeline_mode<synchronous>, transform_indices = @transform_2, window_bounds = array<i64: 1, 2>}, {transform_indices = @transform_3, window_bounds = array<i64: 16, 1>}, {transform_indices = @transform_4, window_bounds = array<i64: 16, 2>}, {transform_indices = @transform_5, window_bounds = array<i64: 1, 2>}]} {
    %c0 = arith.constant 0 : index
    %c0_0 = arith.constant 0 : index
    %0 = vector.load %arg1[%c0, %c0_0] : memref<16x32xbf16, #tpu.memory_space<vmem>>, vector<16x32xbf16>
    %c0_1 = arith.constant 0 : index
    %c0_2 = arith.constant 0 : index
    %1 = vector.load %arg2[%c0_1, %c0_2] : memref<32x2xbf16, #tpu.memory_space<vmem>>, vector<32x2xbf16>
    %cst = arith.constant dense<0.000000e+00> : vector<16x2xf32>
    %2 = tpu.matmul %0, %1, %cst {dimension_numbers = #tpu.dot_dimension_numbers<[1], [0], [0], [1], [0, 0, 1, 1], [], []>} : vector<16x32xbf16>, vector<32x2xbf16>, vector<16x2xf32> -> vector<16x2xf32>
    %c0_3 = arith.constant 0 : index
    %c0_4 = arith.constant 0 : index
    %3 = vector.load %arg3[%c0_3, %c0_4] : memref<1x2xf32, #tpu.memory_space<vmem>>, vector<1x2xf32>
    %4 = vector.broadcast %3 : vector<1x2xf32> to vector<16x2xf32>
    %5 = arith.addf %2, %4 : vector<16x2xf32>
    %c0_5 = arith.constant 0 : index
    %c0_6 = arith.constant 0 : index
    %6 = vector.load %arg5[%c0_5, %c0_6] : memref<16x2xf32, #tpu.memory_space<vmem>>, vector<16x2xf32>
    tpu.vector_store %arg5[%c0_5, %c0_6], %5 {strides = array<i32>} : memref<16x2xf32, #tpu.memory_space<vmem>>, vector<16x2xf32>,
    %c0_7 = arith.constant 0 : index
    %c0_8 = arith.constant 0 : index
    %7 = vector.load %arg4[%c0_7, %c0_8] : memref<16x1xi32, #tpu.memory_space<vmem>>, vector<16x1xi32>
    %cst_9 = arith.constant dense<0xFF800000> : vector<16xf32>
    %8 = vector.multi_reduction <maximumf>, %5, %cst_9 [1] : vector<16x2xf32> to vector<16xf32>
    %9 = vector.shape_cast %8 : vector<16xf32> to vector<16x1xf32>
    %10 = vector.broadcast %9 : vector<16x1xf32> to vector<16x2xf32>
    %11 = arith.subf %5, %10 : vector<16x2xf32>
    %12 = math.exp %11 : vector<16x2xf32>
    %cst_10 = arith.constant dense<0.000000e+00> : vector<16xf32>
    %13 = vector.multi_reduction <add>, %12, %cst_10 [1] : vector<16x2xf32> to vector<16xf32>
    %14 = vector.shape_cast %13 : vector<16xf32> to vector<16x1xf32>
    %15 = math.log %14 : vector<16x1xf32>
    %16 = arith.addf %9, %15 : vector<16x1xf32>
    %17 = vector.broadcast %16 : vector<16x1xf32> to vector<16x2xf32>
    %18 = arith.subf %5, %17 : vector<16x2xf32>
    %c-100_i32 = arith.constant -100 : i32
    %19 = vector.broadcast %c-100_i32 : i32 to vector<16x1xi32>
    %20 = arith.cmpi ne, %7, %19 : vector<16x1xi32>
    %c0_i32 = arith.constant 0 : i32
    %21 = vector.broadcast %c0_i32 : i32 to vector<16x1xi32>
    %22 = arith.select %20, %7, %21 : vector<16x1xi1>, vector<16x1xi32>
    %23 = tpu.iota {dimensions = array<i32: 1>} : vector<16x2xi32>
    %24 = vector.broadcast %22 : vector<16x1xi32> to vector<16x2xi32>
    %25 = arith.cmpi eq, %23, %24 : vector<16x2xi32>
    %cst_11 = arith.constant 0.000000e+00 : f32
    %26 = vector.broadcast %cst_11 : f32 to vector<16x2xf32>
    %27 = arith.select %25, %18, %26 : vector<16x2xi1>, vector<16x2xf32>
    %cst_12 = arith.constant dense<0.000000e+00> : vector<16xf32>
    %28 = vector.multi_reduction <add>, %27, %cst_12 [1] : vector<16x2xf32> to vector<16xf32>
    %29 = vector.shape_cast %28 : vector<16xf32> to vector<16x1xf32>
    %cst_13 = arith.constant 0.000000e+00 : f32
    %30 = vector.broadcast %cst_13 : f32 to vector<16x1xf32>
    %31 = arith.subf %30, %29 : vector<16x1xf32>
    %cst_14 = arith.constant 0.000000e+00 : f32
    %32 = vector.broadcast %cst_14 : f32 to vector<16x1xf32>
    %33 = arith.select %20, %31, %32 : vector<16x1xi1>, vector<16x1xf32>
    %34 = vector.shape_cast %33 : vector<16x1xf32> to vector<1x16x1xf32>
    %cst_15 = arith.constant dense<0.000000e+00> : vector<1xf32>
    %35 = vector.multi_reduction <add>, %34, %cst_15 [1, 2] : vector<1x16x1xf32> to vector<1xf32>
    %36 = vector.shape_cast %35 : vector<1xf32> to vector<1x1x1xf32>
    %37 = vector.extract %36[0, 0, 0] : f32 from vector<1x1x1xf32>
    %c0_16 = arith.constant 0 : index
    %c0_17 = arith.constant 0 : index
    %38 = memref.load %arg6[%c0_16, %c0_17] : memref<1x2xf32, #tpu.memory_space<smem>>
    memref.store %37, %arg6[%c0_16, %c0_17] : memref<1x2xf32, #tpu.memory_space<smem>>
    %39 = arith.extui %20 : vector<16x1xi1> to vector<16x1xi32>
    %40 = arith.sitofp %39 : vector<16x1xi32> to vector<16x1xf32>
    %41 = vector.shape_cast %40 : vector<16x1xf32> to vector<1x16x1xf32>
    %cst_18 = arith.constant dense<0.000000e+00> : vector<1xf32>
    %42 = vector.multi_reduction <add>, %41, %cst_18 [1, 2] : vector<1x16x1xf32> to vector<1xf32>
    %43 = vector.shape_cast %42 : vector<1xf32> to vector<1x1x1xf32>
    %44 = vector.extract %43[0, 0, 0] : f32 from vector<1x1x1xf32>
    %c0_19 = arith.constant 0 : index
    %c1 = arith.constant 1 : index
    %45 = memref.load %arg6[%c0_19, %c1] : memref<1x2xf32, #tpu.memory_space<smem>>
    memref.store %44, %arg6[%c0_19, %c1] : memref<1x2xf32, #tpu.memory_space<smem>>
    return
  }
  func.func @transform_0(%arg0: i32) -> (i32, i32) {
    %c0_i32 = arith.constant 0 : i32
    %c0_i32_0 = arith.constant 0 : i32
    return %arg0, %c0_i32 : i32, i32
  }
  func.func @transform_1(%arg0: i32) -> (i32, i32) {
    %c0_i32 = arith.constant 0 : i32
    %c0_i32_0 = arith.constant 0 : i32
    %c0_i32_1 = arith.constant 0 : i32
    return %c0_i32, %c0_i32_0 : i32, i32
  }
  func.func @transform_2(%arg0: i32) -> (i32, i32) {
    %c0_i32 = arith.constant 0 : i32
    %c0_i32_0 = arith.constant 0 : i32
    %c0_i32_1 = arith.constant 0 : i32
    return %c0_i32, %c0_i32_0 : i32, i32
  }
  func.func @transform_3(%arg0: i32) -> (i32, i32) {
    %c0_i32 = arith.constant 0 : i32
    %c0_i32_0 = arith.constant 0 : i32
    return %arg0, %c0_i32 : i32, i32
  }
  func.func @transform_4(%arg0: i32) -> (i32, i32) {
    %c0_i32 = arith.constant 0 : i32
    %c0_i32_0 = arith.constant 0 : i32
    return %arg0, %c0_i32 : i32, i32
  }
  func.func @transform_5(%arg0: i32) -> (i32, i32) {
    %c0_i32 = arith.constant 0 : i32
    %c0_i32_0 = arith.constant 0 : i32
    return %arg0, %c0_i32 : i32, i32
  }
}

</mosaic_0001>

<llo_original>
// kernel: bert_model_forward.16
$region0: #{bert_model_forward.16}
  #allocation0 [shape = 'u32[]', space=smem, size = 0x4, offset = 0x4, fixed_abs, tag = 'smem constant byte address 0x4 - core index']
  #allocation1 [shape = 'u32[72,128]{1,0:T(1,128)}', space=vmem, size = 0x9000, scoped, tag = 'internal scratch']
  %s0 = inlined_call_operand.vmem [shape: f32[16,32], index: 0, kind: input, shape index: {}]
  %s1 = inlined_call_operand.vmem [shape: f32[1,32], index: 1, kind: input, shape index: {}]
  %s2 = inlined_call_operand.vmem [shape: f32[1,32], index: 2, kind: input, shape index: {}]
  %s3 = inlined_call_operand.vmem [shape: bf16[16,32], index: 3, kind: output, shape index: {}]
  %s4 = sld [smem:[#allocation0]]
  $region22: #{bert_model_forward.16} parent=0
    _
  %s6 = ssub.s32 1, %s4
  %s7 = scalar_select 0, %s6, %s4
  // Predicated region
  $region2: #{bert_model_forward.16} parent=0 // pred_check
    _
  $region3: #{bert_model_forward.16} parent=0 // pred_check_branch
    %9 = sbr.rel (0) target = $region5
  $region4: #{bert_model_forward.16} parent=0 // pred_region
    _
  $region5: #{bert_model_forward.16} parent=0 // pred_fallthru
    _
  // Predicated region
  $region6: #{bert_model_forward.16} parent=0 // pred_check
    _
  $region7: #{bert_model_forward.16} parent=0 // pred_check_branch
    %11 = sbr.rel (0) target = $region9
  $region8: #{bert_model_forward.16} parent=0 // pred_region
    _
  $region9: #{bert_model_forward.16} parent=0 // pred_fallthru
    _
  // Predicated region
  $region10: #{bert_model_forward.16} parent=0 // pred_check
    _
  $region11: #{bert_model_forward.16} parent=0 // pred_check_branch
    %13 = sbr.rel (0) target = $region13
  $region12: #{bert_model_forward.16} parent=0 // pred_region
    _
  $region13: #{bert_model_forward.16} parent=0 // pred_fallthru
    _
  %v14 = vld [vmem:[%s0] sm:$0xff]
  %v15 = vld [vmem:[%s0 + $0x8] sm:$0xff]
  %vm16 = vcmask 261120
  %v17 = vsel %vm16, %v14, 0.0
  %18 = vadd.xlane.f32.xlu0 %v17
  %v19 = vpop.xlane.xlu0 %18
  %v20 = vsel %vm16, %v15, 0.0
  %21 = vadd.xlane.f32.xlu0 %v20
  %v22 = vpop.xlane.xlu0 %21
  %v23 = vrcp.pop 32.0
  %v24 = vmul.f32 32.0, %v23
  %v25 = vsub.f32 1.0, %v24
  %v26 = vmul.f32 %v23, %v25
  %v27 = vadd.f32 %v23, %v26
  %vm28 = vweird.f32 %v23
  %v29 = vsel %vm28, %v23, %v27
  %v30 = vmul.f32 %v19, %v29
  %v31 = vmul.f32 %v22, %v29
  %v32 = vmul.f32 %v14, %v14
  %v33 = vmul.f32 %v15, %v15
  %v34 = vsel %vm16, %v32, 0.0
  %35 = vadd.xlane.f32.xlu0 %v34
  %v36 = vpop.xlane.xlu0 %35
  %v37 = vsel %vm16, %v33, 0.0
  %38 = vadd.xlane.f32.xlu0 %v37
  %v39 = vpop.xlane.xlu0 %38
  %v40 = vmul.f32 %v36, %v29
  %v41 = vmul.f32 %v39, %v29
  %v42 = vmul.f32 %v30, %v30
  %v43 = vmul.f32 %v31, %v31
  %v44 = vsub.f32 %v40, %v42
  %v45 = vsub.f32 %v41, %v43
  %v46 = vmax.f32 %v44, 0.0
  %v47 = vmax.f32 %v45, 0.0
  %v48 = vsub.f32 %v14, %v30
  %v49 = vsub.f32 %v15, %v31
  %v50 = vadd.f32 %v46, 1e-12
  %v51 = vadd.f32 %v47, 1e-12
  %v52 = vrsqrt.pop %v50
  %v53 = vmul.f32 %v52, %v50
  %v54 = vmul.f32 %v53, %v52
  %v55 = vmul.f32 0.5, %v54
  %v56 = vsub.f32 1.5, %v55
  %v57 = vmul.f32 %v52, %v56
  %vm58 = vweird.f32 %v50
  %vm59 = vweird.f32 %v52
  %vm60 = vmor %vm58, %vm59
  %v61 = vsel %vm60, %v52, %v57
  %v62 = vrsqrt.pop %v51
  %v63 = vmul.f32 %v62, %v51
  %v64 = vmul.f32 %v63, %v62
  %v65 = vmul.f32 0.5, %v64
  %v66 = vsub.f32 1.5, %v65
  %v67 = vmul.f32 %v62, %v66
  %vm68 = vweird.f32 %v51
  %vm69 = vweird.f32 %v62
  %vm70 = vmor %vm68, %vm69
  %v71 = vsel %vm70, %v62, %v67
  %v72 = vmul.f32 %v48, %v61
  %v73 = vmul.f32 %v49, %v71
  %v74 = vld [vmem:[%s1] sm:$0x1]
  %v76 = vperm.slane %v74, 0
  %v78 = vmul.f32 %v72, %v76
  %v79 = vmul.f32 %v73, %v76
  %v80 = vld [vmem:[%s2] sm:$0x1]
  %v82 = vperm.slane %v80, 0
  %v84 = vadd.f32 %v78, %v82
  %v85 = vadd.f32 %v79, %v82
  %v86 = vpack.c.bf16 %v84, %v84
  %v87 = vpack.c.bf16 %v85, %v85
  %vm88 = vcmask 257024
  %89 = vst.msk [vmem:[%s3] sm:$0xf] %vm88, %v86
  %90 = vst.msk [vmem:[%s3 + $0x4] sm:$0xf] %vm88, %v87
  // Predicated region
  $region14: #{bert_model_forward.16} parent=0 // pred_check
    _
  $region15: #{bert_model_forward.16} parent=0 // pred_check_branch
    %92 = sbr.rel (0) target = $region17
  $region16: #{bert_model_forward.16} parent=0 // pred_region
    _
  $region17: #{bert_model_forward.16} parent=0 // pred_fallthru
    _
  // Predicated region
  $region18: #{bert_model_forward.16} parent=0 // pred_check
    _
  $region19: #{bert_model_forward.16} parent=0 // pred_check_branch
    %94 = sbr.rel (0) target = $region21
  $region20: #{bert_model_forward.16} parent=0 // pred_region
    _
  $region21: #{bert_model_forward.16} parent=0 // pred_fallthru
    _

// kernel: bert_model_forward.17
$region0: #{bert_model_forward.17}
  #allocation0 [shape = 'u32[]', space=smem, size = 0x4, offset = 0x4, fixed_abs, tag = 'smem constant byte address 0x4 - core index']
  #allocation1 [shape = 'u32[72,128]{1,0:T(1,128)}', space=vmem, size = 0x9000, scoped, tag = 'internal scratch']
  #allocation2 [shape = 'f32[16,32]{1,0:T(8,128)}', space=vmem, size = 0x2000, scoped, tag = 'scratch operand']
  %s0 = inlined_call_operand.vmem [shape: bf16[16,32], index: 0, kind: input, shape index: {}]
  %s1 = inlined_call_operand.vmem [shape: bf16[32,32], index: 1, kind: input, shape index: {}]
  %s2 = inlined_call_operand.vmem [shape: f32[1,32], index: 2, kind: input, shape index: {}]
  %s3 = inlined_call_operand.vmem [shape: bf16[16,32], index: 3, kind: output, shape index: {}]
  %s4 = sld [smem:[#allocation0]]
  $region30: #{bert_model_forward.17} parent=0
    _
  %s6 = ssub.s32 1, %s4
  %s7 = scalar_select 0, %s6, %s4
  // Predicated region
  $region2: #{bert_model_forward.17} parent=0 // pred_check
    _
  $region3: #{bert_model_forward.17} parent=0 // pred_check_branch
    %9 = sbr.rel (0) target = $region5
  $region4: #{bert_model_forward.17} parent=0 // pred_region
    _
  $region5: #{bert_model_forward.17} parent=0 // pred_fallthru
    _
  // Predicated region
  $region6: #{bert_model_forward.17} parent=0 // pred_check
    _
  $region7: #{bert_model_forward.17} parent=0 // pred_check_branch
    %11 = sbr.rel (0) target = $region9
  $region8: #{bert_model_forward.17} parent=0 // pred_region
    _
  $region9: #{bert_model_forward.17} parent=0 // pred_fallthru
    _
  // Predicated region
  $region10: #{bert_model_forward.17} parent=0 // pred_check
    _
  $region11: #{bert_model_forward.17} parent=0 // pred_check_branch
    %13 = sbr.rel (0) target = $region13
  $region12: #{bert_model_forward.17} parent=0 // pred_region
    _
  $region13: #{bert_model_forward.17} parent=0 // pred_fallthru
    _
  %p15 = scmp.eq.s32.totalorder 0, 0
  // Predicated region
  $region14: #{bert_model_forward.17} parent=0 // pred_check
    %p16 = pneg %p15
  $region15: #{bert_model_forward.17} parent=0 // pred_check_branch
    %18 = sbr.rel (%p16) target = $region17
  $region16: #{bert_model_forward.17} parent=0 // pred_region
    %vm19 = vcmask 261120
    %20 = vst.msk [vmem:[#allocation2] sm:$0xff] %vm19, 0.0
    %21 = vst.msk [vmem:[#allocation2 + $0x8] sm:$0xff] %vm19, 0.0
  $region17: #{bert_model_forward.17} parent=0 // pred_fallthru
    _
  %v22 = vld [vmem:[#allocation2] sm:$0xff]
  %v23 = vld [vmem:[#allocation2 + $0x8] sm:$0xff]
  %v24 = vld [vmem:[%s0] sm:$0xf]
  %v25 = vld [vmem:[%s0 + $0x4] sm:$0xf]
  %v26 = vld [vmem:[%s1] sm:$0xf]
  %v27 = vld [vmem:[%s1 + $0x4] sm:$0xf]
  %v28 = vld [vmem:[%s1 + $0x8] sm:$0xf]
  %v29 = vld [vmem:[%s1 + $0xc] sm:$0xf]
  %v32 = vunpack.c.l.b16 %v24
  %v33 = vunpack.c.l.b16 %v25
  %v34 = vpack.c.b16 %v33, %v32
  %v39 = vunpack.c.l.b16 %v26
  %v40 = vunpack.c.l.b16 %v27
  %v41 = vunpack.c.l.b16 %v28
  %v42 = vunpack.c.l.b16 %v29
  %v43 = vpack.c.b16 %v40, %v39
  %v44 = vpack.c.b16 %v42, %v41
  %vm47 = vcmask 261120
  %v49 = vsel %vm47, %v34, 0
  %51 = vmatpush.bf16.msra.mxu0 0
  %52 = vmatpush.bf16.msra.mxu0 0
  %53 = vmatpush.bf16.msra.mxu0 0
  %54 = vmatpush.bf16.msra.mxu0 0
  %55 = vmatpush.bf16.msra.mxu0 0
  %56 = vmatpush.bf16.msra.mxu0 0
  %57 = vmatpush.bf16.msra.mxu0 %v44
  %58 = vmatpush.bf16.msra.mxu0 %v43
  %59 = vmatmul.bf16.gmra.mxu0 %v49
  %v60 = vpop.f32.mrf.mxu0
  %v61 = vadd.f32 0.0, %v60
  %v62 = vpop.f32.mrf.mxu0
  %v63 = vadd.f32 0.0, %v62
  %64 = vdwg.mxu0
  %v65 = vadd.f32 %v22, %v61
  %v66 = vadd.f32 %v23, %v63
  %67 = vst.msk [vmem:[#allocation2] sm:$0xff] %vm47, %v65
  %68 = vst.msk [vmem:[#allocation2 + $0x8] sm:$0xff] %vm47, %v66
  // Predicated region
  $region18: #{bert_model_forward.17} parent=0 // pred_check
    %p69 = pneg %p15
  $region19: #{bert_model_forward.17} parent=0 // pred_check_branch
    %71 = sbr.rel (%p69) target = $region21
  $region20: #{bert_model_forward.17} parent=0 // pred_region
    %v72 = vld [vmem:[#allocation2] sm:$0xff]
    %v73 = vld [vmem:[#allocation2 + $0x8] sm:$0xff]
    %v74 = vld [vmem:[%s2] sm:$0x1]
    %v76 = vperm.slane %v74, 0
    %v78 = vadd.f32 %v72, %v76
    %v79 = vadd.f32 %v73, %v76
    %v80 = vpack.c.bf16 %v78, %v78
    %v81 = vpack.c.bf16 %v79, %v79
    %vm82 = vcmask 257024
    %83 = vst.msk [vmem:[%s3] sm:$0xf] %vm82, %v80
    %84 = vst.msk [vmem:[%s3 + $0x4] sm:$0xf] %vm82, %v81
  $region21: #{bert_model_forward.17} parent=0 // pred_fallthru
    _
  // Predicated region
  $region22: #{bert_model_forward.17} parent=0 // pred_check
    _
  $region23: #{bert_model_forward.17} parent=0 // pred_check_branch
    %86 = sbr.rel (0) target = $region25
  $region24: #{bert_model_forward.17} parent=0 // pred_region
    _
  $region25: #{bert_model_forward.17} parent=0 // pred_fallthru
    _
  // Predicated region
  $region26: #{bert_model_forward.17} parent=0 // pred_check
    _
  $region27: #{bert_model_forward.17} parent=0 // pred_check_branch
    %88 = sbr.rel (0) target = $region29
  $region28: #{bert_model_forward.17} parent=0 // pred_region
    _
  $region29: #{bert_model_forward.17} parent=0 // pred_fallthru
    _

// kernel: bert_model_forward.21
$region0: #{bert_model_forward.21}
  #allocation0 [shape = 'u32[]', space=smem, size = 0x4, offset = 0x4, fixed_abs, tag = 'smem constant byte address 0x4 - core index']
  #allocation1 [shape = 'u32[72,128]{1,0:T(1,128)}', space=vmem, size = 0x9000, scoped, tag = 'internal scratch']
  #allocation2 [shape = 'f32[16,32]{1,0:T(8,128)}', space=vmem, size = 0x2000, scoped, tag = 'scratch operand']
  %s0 = inlined_call_operand.vmem [shape: bf16[16,32], index: 0, kind: input, shape index: {}]
  %s1 = inlined_call_operand.vmem [shape: bf16[32,32], index: 1, kind: input, shape index: {}]
  %s2 = inlined_call_operand.vmem [shape: f32[1,32], index: 2, kind: input, shape index: {}]
  %s3 = inlined_call_operand.vmem [shape: bf16[16,32], index: 3, kind: input, shape index: {}]
  %s4 = inlined_call_operand.vmem [shape: f32[1,32], index: 4, kind: input, shape index: {}]
  %s5 = inlined_call_operand.vmem [shape: f32[1,32], index: 5, kind: input, shape index: {}]
  %s6 = inlined_call_operand.vmem [shape: bf16[16,32], index: 6, kind: output, shape index: {}]
  %s7 = sld [smem:[#allocation0]]
  $region42: #{bert_model_forward.21} parent=0
    _
  %s9 = ssub.s32 1, %s7
  %s10 = scalar_select 0, %s9, %s7
  // Predicated region
  $region2: #{bert_model_forward.21} parent=0 // pred_check
    _
  $region3: #{bert_model_forward.21} parent=0 // pred_check_branch
    %12 = sbr.rel (0) target = $region5
  $region4: #{bert_model_forward.21} parent=0 // pred_region
    _
  $region5: #{bert_model_forward.21} parent=0 // pred_fallthru
    _
  // Predicated region
  $region6: #{bert_model_forward.21} parent=0 // pred_check
    _
  $region7: #{bert_model_forward.21} parent=0 // pred_check_branch
    %14 = sbr.rel (0) target = $region9
  $region8: #{bert_model_forward.21} parent=0 // pred_region
    _
  $region9: #{bert_model_forward.21} parent=0 // pred_fallthru
    _
  // Predicated region
  $region10: #{bert_model_forward.21} parent=0 // pred_check
    _
  $region11: #{bert_model_forward.21} parent=0 // pred_check_branch
    %16 = sbr.rel (0) target = $region13
  $region12: #{bert_model_forward.21} parent=0 // pred_region
    _
  $region13: #{bert_model_forward.21} parent=0 // pred_fallthru
    _
  // Predicated region
  $region14: #{bert_model_forward.21} parent=0 // pred_check
    _
  $region15: #{bert_model_forward.21} parent=0 // pred_check_branch
    %18 = sbr.rel (0) target = $region17
  $region16: #{bert_model_forward.21} parent=0 // pred_region
    _
  $region17: #{bert_model_forward.21} parent=0 // pred_fallthru
    _
  // Predicated region
  $region18: #{bert_model_forward.21} parent=0 // pred_check
    _
  $region19: #{bert_model_forward.21} parent=0 // pred_check_branch
    %20 = sbr.rel (0) target = $region21
  $region20: #{bert_model_forward.21} parent=0 // pred_region
    _
  $region21: #{bert_model_forward.21} parent=0 // pred_fallthru
    _
  // Predicated region
  $region22: #{bert_model_forward.21} parent=0 // pred_check
    _
  $region23: #{bert_model_forward.21} parent=0 // pred_check_branch
    %22 = sbr.rel (0) target = $region25
  $region24: #{bert_model_forward.21} parent=0 // pred_region
    _
  $region25: #{bert_model_forward.21} parent=0 // pred_fallthru
    _
  %p24 = scmp.eq.s32.totalorder 0, 0
  // Predicated region
  $region26: #{bert_model_forward.21} parent=0 // pred_check
    %p25 = pneg %p24
  $region27: #{bert_model_forward.21} parent=0 // pred_check_branch
    %27 = sbr.rel (%p25) target = $region29
  $region28: #{bert_model_forward.21} parent=0 // pred_region
    %vm28 = vcmask 261120
    %29 = vst.msk [vmem:[#allocation2] sm:$0xff] %vm28, 0.0
    %30 = vst.msk [vmem:[#allocation2 + $0x8] sm:$0xff] %vm28, 0.0
  $region29: #{bert_model_forward.21} parent=0 // pred_fallthru
    _
  %v31 = vld [vmem:[#allocation2] sm:$0xff]
  %v32 = vld [vmem:[#allocation2 + $0x8] sm:$0xff]
  %v33 = vld [vmem:[%s0] sm:$0xf]
  %v34 = vld [vmem:[%s0 + $0x4] sm:$0xf]
  %v35 = vld [vmem:[%s1] sm:$0xf]
  %v36 = vld [vmem:[%s1 + $0x4] sm:$0xf]
  %v37 = vld [vmem:[%s1 + $0x8] sm:$0xf]
  %v38 = vld [vmem:[%s1 + $0xc] sm:$0xf]
  %v41 = vunpack.c.l.b16 %v33
  %v42 = vunpack.c.l.b16 %v34
  %v43 = vpack.c.b16 %v42, %v41
  %v48 = vunpack.c.l.b16 %v35
  %v49 = vunpack.c.l.b16 %v36
  %v50 = vunpack.c.l.b16 %v37
  %v51 = vunpack.c.l.b16 %v38
  %v52 = vpack.c.b16 %v49, %v48
  %v53 = vpack.c.b16 %v51, %v50
  %vm56 = vcmask 261120
  %v58 = vsel %vm56, %v43, 0
  %60 = vmatpush.bf16.msra.mxu0 0
  %61 = vmatpush.bf16.msra.mxu0 0
  %62 = vmatpush.bf16.msra.mxu0 0
  %63 = vmatpush.bf16.msra.mxu0 0
  %64 = vmatpush.bf16.msra.mxu0 0
  %65 = vmatpush.bf16.msra.mxu0 0
  %66 = vmatpush.bf16.msra.mxu0 %v53
  %67 = vmatpush.bf16.msra.mxu0 %v52
  %68 = vmatmul.bf16.gmra.mxu0 %v58
  %v69 = vpop.f32.mrf.mxu0
  %v70 = vadd.f32 0.0, %v69
  %v71 = vpop.f32.mrf.mxu0
  %v72 = vadd.f32 0.0, %v71
  %73 = vdwg.mxu0
  %v74 = vadd.f32 %v31, %v70
  %v75 = vadd.f32 %v32, %v72
  %76 = vst.msk [vmem:[#allocation2] sm:$0xff] %vm56, %v74
  %77 = vst.msk [vmem:[#allocation2 + $0x8] sm:$0xff] %vm56, %v75
  // Predicated region
  $region30: #{bert_model_forward.21} parent=0 // pred_check
    %p78 = pneg %p24
  $region31: #{bert_model_forward.21} parent=0 // pred_check_branch
    %80 = sbr.rel (%p78) target = $region33
  $region32: #{bert_model_forward.21} parent=0 // pred_region
    %v81 = vld [vmem:[#allocation2] sm:$0xff]
    %v82 = vld [vmem:[#allocation2 + $0x8] sm:$0xff]
    %v83 = vld [vmem:[%s2] sm:$0x1]
    %v85 = vperm.slane %v83, 0
    %v87 = vadd.f32 %v81, %v85
    %v88 = vadd.f32 %v82, %v85
    %v89 = vld [vmem:[%s3] sm:$0xf]
    %v90 = vld [vmem:[%s3 + $0x4] sm:$0xf]
    %v91 = vunpack.c.l.bf16 %v89
    %v92 = vunpack.c.l.bf16 %v90
    %v93 = vadd.f32 %v87, %v91
    %v94 = vadd.f32 %v88, %v92
    %v95 = vsel %vm56, %v93, 0.0
    %96 = vadd.xlane.f32.xlu0 %v95
    %v97 = vpop.xlane.xlu0 %96
    %v98 = vsel %vm56, %v94, 0.0
    %99 = vadd.xlane.f32.xlu0 %v98
    %v100 = vpop.xlane.xlu0 %99
    %v101 = vrcp.pop 32.0
    %v102 = vmul.f32 32.0, %v101
    %v103 = vsub.f32 1.0, %v102
    %v104 = vmul.f32 %v101, %v103
    %v105 = vadd.f32 %v101, %v104
    %vm106 = vweird.f32 %v101
    %v107 = vsel %vm106, %v101, %v105
    %v108 = vmul.f32 %v97, %v107
    %v109 = vmul.f32 %v100, %v107
    %v110 = vmul.f32 %v93, %v93
    %v111 = vmul.f32 %v94, %v94
    %v112 = vsel %vm56, %v110, 0.0
    %113 = vadd.xlane.f32.xlu0 %v112
    %v114 = vpop.xlane.xlu0 %113
    %v115 = vsel %vm56, %v111, 0.0
    %116 = vadd.xlane.f32.xlu0 %v115
    %v117 = vpop.xlane.xlu0 %116
    %v118 = vmul.f32 %v114, %v107
    %v119 = vmul.f32 %v117, %v107
    %v120 = vmul.f32 %v108, %v108
    %v121 = vmul.f32 %v109, %v109
    %v122 = vsub.f32 %v118, %v120
    %v123 = vsub.f32 %v119, %v121
    %v124 = vmax.f32 %v122, 0.0
    %v125 = vmax.f32 %v123, 0.0
    %v126 = vsub.f32 %v93, %v108
    %v127 = vsub.f32 %v94, %v109
    %v128 = vadd.f32 %v124, 1e-12
    %v129 = vadd.f32 %v125, 1e-12
    %v130 = vrsqrt.pop %v128
    %v131 = vmul.f32 %v130, %v128
    %v132 = vmul.f32 %v131, %v130
    %v133 = vmul.f32 0.5, %v132
    %v134 = vsub.f32 1.5, %v133
    %v135 = vmul.f32 %v130, %v134
    %vm136 = vweird.f32 %v128
    %vm137 = vweird.f32 %v130
    %vm138 = vmor %vm136, %vm137
    %v139 = vsel %vm138, %v130, %v135
    %v140 = vrsqrt.pop %v129
    %v141 = vmul.f32 %v140, %v129
    %v142 = vmul.f32 %v141, %v140
    %v143 = vmul.f32 0.5, %v142
    %v144 = vsub.f32 1.5, %v143
    %v145 = vmul.f32 %v140, %v144
    %vm146 = vweird.f32 %v129
    %vm147 = vweird.f32 %v140
    %vm148 = vmor %vm146, %vm147
    %v149 = vsel %vm148, %v140, %v145
    %v150 = vmul.f32 %v126, %v139
    %v151 = vmul.f32 %v127, %v149
    %v152 = vld [vmem:[%s4] sm:$0x1]
    %v154 = vperm.slane %v152, 0
    %v156 = vmul.f32 %v150, %v154
    %v157 = vmul.f32 %v151, %v154
    %v158 = vld [vmem:[%s5] sm:$0x1]
    %v160 = vperm.slane %v158, 0
    %v162 = vadd.f32 %v156, %v160
    %v163 = vadd.f32 %v157, %v160
    %v164 = vpack.c.bf16 %v162, %v162
    %v165 = vpack.c.bf16 %v163, %v163
    %vm166 = vcmask 257024
    %167 = vst.msk [vmem:[%s6] sm:$0xf] %vm166, %v164
    %168 = vst.msk [vmem:[%s6 + $0x4] sm:$0xf] %vm166, %v165
  $region33: #{bert_model_forward.21} parent=0 // pred_fallthru
    _
  // Predicated region
  $region34: #{bert_model_forward.21} parent=0 // pred_check
    _
  $region35: #{bert_model_forward.21} parent=0 // pred_check_branch
    %170 = sbr.rel (0) target = $region37
  $region36: #{bert_model_forward.21} parent=0 // pred_region
    _
  $region37: #{bert_model_forward.21} parent=0 // pred_fallthru
    _
  // Predicated region
  $region38: #{bert_model_forward.21} parent=0 // pred_check
    _
  $region39: #{bert_model_forward.21} parent=0 // pred_check_branch
    %172 = sbr.rel (0) target = $region41
  $region40: #{bert_model_forward.21} parent=0 // pred_region
    _
  $region41: #{bert_model_forward.21} parent=0 // pred_fallthru
    _

// kernel: bert_model_forward.20
$region0: #{bert_model_forward.20}
  #allocation0 [shape = 'u32[]', space=smem, size = 0x4, offset = 0x4, fixed_abs, tag = 'smem constant byte address 0x4 - core index']
  #allocation1 [shape = 'u32[72,128]{1,0:T(1,128)}', space=vmem, size = 0x9000, scoped, tag = 'internal scratch']
  #allocation2 [shape = 'f32[2,8,1]{2,1,0:T(8,128)}', space=vmem, size = 0x2000, scoped, tag = 'scratch operand']
  #allocation3 [shape = 'f32[2,8,1]{2,1,0:T(8,128)}', space=vmem, size = 0x2000, scoped, tag = 'scratch operand']
  #allocation4 [shape = 'f32[2,8,16]{2,1,0:T(8,128)}', space=vmem, size = 0x2000, scoped, tag = 'scratch operand']
  %s0 = inlined_call_operand.vmem [shape: bf16[16,32], index: 0, kind: input, shape index: {}]
  %s1 = inlined_call_operand.vmem [shape: bf16[16,32], index: 1, kind: input, shape index: {}]
  %s2 = inlined_call_operand.vmem [shape: bf16[16,32], index: 2, kind: input, shape index: {}]
  %s3 = inlined_call_operand.vmem [shape: f32[2,1,8], index: 3, kind: input, shape index: {}]
  %s4 = inlined_call_operand.vmem [shape: bf16[16,32], index: 4, kind: output, shape index: {}]
  %s5 = sld [smem:[#allocation0]]
  $region57: #{bert_model_forward.20} parent=0
    _
  %s7 = ssub.s32 1, %s5
  %s8 = scalar_select 0, %s7, %s5
  loop: start=0, step=1, limit=4
  $region2: #{bert_model_forward.20} parent=0 // loop_pre_header
    _
  $region3: #{bert_model_forward.20} parent=0 // loop_header
    %s10 = sphi 0, %s14
    %p11 = scmp.ge.s32.totalorder %s10, 4
    %s17 = sphi 0, %s36
    %s18 = sphi 0, %s32
    %s19 = sphi 0, %s28
    %s20 = sphi 0, %s17
    %s21 = sphi 0, %s18
    %s22 = sphi 0, %s19
    %s23 = sphi 0, %s20
    %s24 = sphi 0, %s21
    %s25 = sphi 0, %s22
    %s41 = sphi 0, %s43
    %s44 = sphi 0, %s41
    %s45 = sphi 0, %s44
    %s61 = sphi 0, %s45
    %s69 = sphi 0, %s71
    %s72 = sphi 0, %s69
    %s73 = sphi 0, %s72
    %s89 = sphi 0, %s73
    %s97 = sphi 0, %s99
    %s100 = sphi 0, %s97
    %s101 = sphi 0, %s100
    %s117 = sphi 0, %s101
    %s125 = sphi 0, %s127
    %s128 = sphi 0, %s125
    %s129 = sphi 0, %s128
    %s145 = sphi 0, %s129
    %s153 = sphi 0, %s155
    %s156 = sphi 0, %s153
    %s157 = sphi 0, %s156
    %s173 = sphi 0, %s157
  $region4: #{bert_model_forward.20} parent=0 // loop_header_branch
    %13 = sbr.rel (%p11) target = $region8
  $region5: #{bert_model_forward.20} parent=0 // loop_body
    %s15 = ssub.s32 %s10, 1
    %s16 = ssub.s32 %s10, 2
    %s26 = sadd.s32 1, %s19
    %p27 = scmp.ge.s32.totalorder %s26, 1
    %s28 = scalar_select %p27, 0, %s26
    %s29 = sadd.s32 1, %s18
    %s30 = scalar_select %p27, %s29, %s18
    %p31 = scmp.ge.s32.totalorder %s30, 1
    %s32 = scalar_select %p31, 0, %s30
    %s33 = sadd.s32 1, %s17
    %s34 = scalar_select %p31, %s33, %s17
    %p35 = scmp.ge.s32.totalorder %s34, 2
    %s36 = scalar_select %p35, 0, %s34
    %s37 = sadd.s32 %s17, %s18
    %s38 = sadd.s32 %s36, %s32
    %s39 = ssub.s32 %s37, %s38
    %p40 = scmp.eq.s32.totalorder %s39, 0
    %s42 = sadd.s32 %s41, 1
    %s43 = scalar_select %p40, %s41, %s42
    %p46 = pneg %p40
    %p47 = scmp.eq.s32.totalorder %s10, 1
    %p48 = por %p46, %p47
    %p49 = scmp.ne.s32.totalorder %s41, %s44
    %p50 = scmp.eq.s32.totalorder %s10, 0
    %p51 = por %p49, %p50
    %p52 = scmp.ne.s32.totalorder %s41, %s44
    %p53 = scmp.eq.s32.totalorder %s15, 1
    %p54 = por %p52, %p53
    %p55 = scmp.ne.s32.totalorder %s44, %s45
    %p56 = scmp.eq.s32.totalorder %s15, 0
    %p57 = por %p55, %p56
    %p58 = scmp.ne.s32.totalorder %s44, %s45
    %p59 = scmp.eq.s32.totalorder %s16, 1
    %p60 = por %p58, %p59
    %p62 = scmp.ne.s32.totalorder %s45, %s61
    %p63 = scmp.eq.s32.totalorder %s16, 0
    %p64 = por %p62, %p63
    %s65 = sadd.s32 %s17, %s19
    %s66 = sadd.s32 %s36, %s28
    %s67 = ssub.s32 %s65, %s66
    %p68 = scmp.eq.s32.totalorder %s67, 0
    %s70 = sadd.s32 %s69, 1
    %s71 = scalar_select %p68, %s69, %s70
    %p74 = pneg %p68
    %p75 = scmp.eq.s32.totalorder %s10, 1
    %p76 = por %p74, %p75
    %p77 = scmp.ne.s32.totalorder %s69, %s72
    %p78 = scmp.eq.s32.totalorder %s10, 0
    %p79 = por %p77, %p78
    %p80 = scmp.ne.s32.totalorder %s69, %s72
    %p81 = scmp.eq.s32.totalorder %s15, 1
    %p82 = por %p80, %p81
    %p83 = scmp.ne.s32.totalorder %s72, %s73
    %p84 = scmp.eq.s32.totalorder %s15, 0
    %p85 = por %p83, %p84
    %p86 = scmp.ne.s32.totalorder %s72, %s73
    %p87 = scmp.eq.s32.totalorder %s16, 1
    %p88 = por %p86, %p87
    %p90 = scmp.ne.s32.totalorder %s73, %s89
    %p91 = scmp.eq.s32.totalorder %s16, 0
    %p92 = por %p90, %p91
    %s93 = sadd.s32 %s17, %s19
    %s94 = sadd.s32 %s36, %s28
    %s95 = ssub.s32 %s93, %s94
    %p96 = scmp.eq.s32.totalorder %s95, 0
    %s98 = sadd.s32 %s97, 1
    %s99 = scalar_select %p96, %s97, %s98
    %p102 = pneg %p96
    %p103 = scmp.eq.s32.totalorder %s10, 1
    %p104 = por %p102, %p103
    %p105 = scmp.ne.s32.totalorder %s97, %s100
    %p106 = scmp.eq.s32.totalorder %s10, 0
    %p107 = por %p105, %p106
    %p108 = scmp.ne.s32.totalorder %s97, %s100
    %p109 = scmp.eq.s32.totalorder %s15, 1
    %p110 = por %p108, %p109
    %p111 = scmp.ne.s32.totalorder %s100, %s101
    %p112 = scmp.eq.s32.totalorder %s15, 0
    %p113 = por %p111, %p112
    %p114 = scmp.ne.s32.totalorder %s100, %s101
    %p115 = scmp.eq.s32.totalorder %s16, 1
    %p116 = por %p114, %p115
    %p118 = scmp.ne.s32.totalorder %s101, %s117
    %p119 = scmp.eq.s32.totalorder %s16, 0
    %p120 = por %p118, %p119
    %s121 = ssub.s32 %s17, %s36
    %s122 = ssub.s32 %s19, %s28
    %s123 = sor.u32 %s121, %s122
    %p124 = scmp.eq.s32.totalorder %s123, 0
    %s126 = sadd.s32 %s125, 1
    %s127 = scalar_select %p124, %s125, %s126
    %p130 = pneg %p124
    %p131 = scmp.eq.s32.totalorder %s10, 1
    %p132 = por %p130, %p131
    %p133 = scmp.ne.s32.totalorder %s125, %s128
    %p134 = scmp.eq.s32.totalorder %s10, 0
    %p135 = por %p133, %p134
    %p136 = scmp.ne.s32.totalorder %s125, %s128
    %p137 = scmp.eq.s32.totalorder %s15, 1
    %p138 = por %p136, %p137
    %p139 = scmp.ne.s32.totalorder %s128, %s129
    %p140 = scmp.eq.s32.totalorder %s15, 0
    %p141 = por %p139, %p140
    %p142 = scmp.ne.s32.totalorder %s128, %s129
    %p143 = scmp.eq.s32.totalorder %s16, 1
    %p144 = por %p142, %p143
    %p146 = scmp.ne.s32.totalorder %s129, %s145
    %p147 = scmp.eq.s32.totalorder %s16, 0
    %p148 = por %p146, %p147
    %s149 = sadd.s32 %s17, %s18
    %s150 = sadd.s32 %s36, %s32
    %s151 = ssub.s32 %s149, %s150
    %p152 = scmp.eq.s32.totalorder %s151, 0
    %s154 = sadd.s32 %s153, 1
    %s155 = scalar_select %p152, %s153, %s154
    %p158 = pneg %p152
    %p159 = scmp.eq.s32.totalorder %s10, 1
    %p160 = por %p158, %p159
    %p161 = scmp.ne.s32.totalorder %s153, %s156
    %p162 = scmp.eq.s32.totalorder %s10, 0
    %p163 = por %p161, %p162
    %p164 = scmp.ne.s32.totalorder %s153, %s156
    %p165 = scmp.eq.s32.totalorder %s15, 1
    %p166 = por %p164, %p165
    %p167 = scmp.ne.s32.totalorder %s156, %s157
    %p168 = scmp.eq.s32.totalorder %s15, 0
    %p169 = por %p167, %p168
    %p170 = scmp.ne.s32.totalorder %s156, %s157
    %p171 = scmp.eq.s32.totalorder %s16, 1
    %p172 = por %p170, %p171
    %p174 = scmp.ne.s32.totalorder %s157, %s173
    %p175 = scmp.eq.s32.totalorder %s16, 0
    %p176 = por %p174, %p175
    %p177 = scmp.le.s32.totalorder 1, %s10
    %p178 = scmp.lt.s32.totalorder %s10, 3
    %p179 = pnand %p177, %p178
    %p180 = pneg %p179
    // Predicated region
    $region9: #{bert_model_forward.20} parent=5 // pred_check
      _
    $region10: #{bert_model_forward.20} parent=5 // pred_check_branch
      %182 = sbr.rel (%p179) target = $region12
    $region11: #{bert_model_forward.20} parent=5 // pred_region
      %s183 = ssub.s32 %s10, 1
    $region12: #{bert_model_forward.20} parent=5 // pred_fallthru
      _
    %p184 = scmp.lt.s32.totalorder %s10, 2
    // Predicated region
    $region13: #{bert_model_forward.20} parent=5 // pred_check
      %p185 = pneg %p184
    $region14: #{bert_model_forward.20} parent=5 // pred_check_branch
      %187 = sbr.rel (%p185) target = $region16
    $region15: #{bert_model_forward.20} parent=5 // pred_region
      // Predicated region
      $region17: #{bert_model_forward.20} parent=15 // pred_check
        %p188 = pneg %p51
      $region18: #{bert_model_forward.20} parent=15 // pred_check_branch
        %190 = sbr.rel (%p188) target = $region20
      $region19: #{bert_model_forward.20} parent=15 // pred_region
        %s191 = sadd.s32 %s17, %s18
        %p192 = scmp.lt.s32.totalorder %s191, 1
        %s193 = scalar_select %p192, %s191, 1
        %s194 = smul.addr %s193, 4
        %s195 = scalar_lea.vmem %s0, %s194
        %s196 = sadd.s32 %s17, %s18
      $region20: #{bert_model_forward.20} parent=15 // pred_fallthru
        _
      // Predicated region
      $region21: #{bert_model_forward.20} parent=15 // pred_check
        %p197 = pneg %p79
      $region22: #{bert_model_forward.20} parent=15 // pred_check_branch
        %199 = sbr.rel (%p197) target = $region24
      $region23: #{bert_model_forward.20} parent=15 // pred_region
        %s200 = sadd.s32 %s17, %s19
        %p201 = scmp.lt.s32.totalorder %s200, 1
        %s202 = scalar_select %p201, %s200, 1
        %s203 = smul.addr %s202, 4
        %s204 = scalar_lea.vmem %s1, %s203
        %s205 = sadd.s32 %s17, %s19
      $region24: #{bert_model_forward.20} parent=15 // pred_fallthru
        _
      // Predicated region
      $region25: #{bert_model_forward.20} parent=15 // pred_check
        %p206 = pneg %p107
      $region26: #{bert_model_forward.20} parent=15 // pred_check_branch
        %208 = sbr.rel (%p206) target = $region28
      $region27: #{bert_model_forward.20} parent=15 // pred_region
        %s209 = sadd.s32 %s17, %s19
        %p210 = scmp.lt.s32.totalorder %s209, 1
        %s211 = scalar_select %p210, %s209, 1
        %s212 = smul.addr %s211, 4
        %s213 = scalar_lea.vmem %s2, %s212
        %s214 = sadd.s32 %s17, %s19
      $region28: #{bert_model_forward.20} parent=15 // pred_fallthru
        _
      // Predicated region
      $region29: #{bert_model_forward.20} parent=15 // pred_check
        %p215 = pneg %p135
      $region30: #{bert_model_forward.20} parent=15 // pred_check_branch
        %217 = sbr.rel (%p215) target = $region32
      $region31: #{bert_model_forward.20} parent=15 // pred_region
        %p218 = scmp.lt.s32.totalorder %s17, 1
        %s219 = scalar_select %p218, %s17, 1
        %p220 = scmp.lt.s32.totalorder %s19, 0
        %s221 = scalar_select %p220, %s19, 0
        %s222 = sadd.s32 %s221, %s219
        %s223 = scalar_lea.vmem %s3, %s222
      $region32: #{bert_model_forward.20} parent=15 // pred_fallthru
        _
    $region16: #{bert_model_forward.20} parent=5 // pred_fallthru
      _
    %p224 = scmp.le.s32.totalorder 1, %s10
    %p225 = scmp.lt.s32.totalorder %s10, 3
    %p226 = pnand %p224, %p225
    %p227 = pneg %p226
    // Predicated region
    $region33: #{bert_model_forward.20} parent=5 // pred_check
      _
    $region34: #{bert_model_forward.20} parent=5 // pred_check_branch
      %229 = sbr.rel (%p226) target = $region36
    $region35: #{bert_model_forward.20} parent=5 // pred_region
      %s230 = ssub.s32 %s10, 1
      %s231 = sadd.s32 %s20, %s21
      %p232 = scmp.lt.s32.totalorder %s231, 1
      %s233 = scalar_select %p232, %s231, 1
      %s234 = smul.addr %s233, 4
      %s235 = scalar_lea.vmem %s0, %s234
      %p236 = pneg %p57
      %p237 = pneg %p54
      %s238 = sadd.s32 %s20, %s22
      %p239 = scmp.lt.s32.totalorder %s238, 1
      %s240 = scalar_select %p239, %s238, 1
      %s241 = smul.addr %s240, 4
      %s242 = scalar_lea.vmem %s1, %s241
      %p243 = pneg %p85
      %p244 = pneg %p82
      %s245 = sadd.s32 %s20, %s22
      %p246 = scmp.lt.s32.totalorder %s245, 1
      %s247 = scalar_select %p246, %s245, 1
      %s248 = smul.addr %s247, 4
      %s249 = scalar_lea.vmem %s2, %s248
      %p250 = pneg %p113
      %p251 = pneg %p110
      %p252 = scmp.lt.s32.totalorder %s20, 1
      %s253 = scalar_select %p252, %s20, 1
      %p254 = scmp.lt.s32.totalorder %s22, 0
      %s255 = scalar_select %p254, %s22, 0
      %s256 = sadd.s32 %s255, %s253
      %s257 = scalar_lea.vmem %s3, %s256
      %p258 = pneg %p141
      %p259 = pneg %p138
      %p260 = pneg %p169
      %p261 = pneg %p166
      %s262 = sadd.s32 %s20, %s21
      %p263 = scmp.lt.s32.totalorder %s262, 1
      %s264 = scalar_select %p263, %s262, 1
      %s265 = smul.addr %s264, 4
      %s266 = scalar_lea.vmem %s4, %s265
      %s267 = sadd.s32 %s20, %s21
      %p268 = scmp.lt.s32.totalorder %s267, 1
      %s269 = scalar_select %p268, %s267, 1
      %s270 = smul.addr %s269, 4
      %s271 = scalar_lea.vmem %s0, %s270
      %s272 = sadd.s32 %s20, %s21
      %s273 = sadd.s32 %s20, %s22
      %p274 = scmp.lt.s32.totalorder %s273, 1
      %s275 = scalar_select %p274, %s273, 1
      %s276 = smul.addr %s275, 4
      %s277 = scalar_lea.vmem %s1, %s276
      %s278 = sadd.s32 %s20, %s22
      %s279 = sadd.s32 %s20, %s22
      %p280 = scmp.lt.s32.totalorder %s279, 1
      %s281 = scalar_select %p280, %s279, 1
      %s282 = smul.addr %s281, 4
      %s283 = scalar_lea.vmem %s2, %s282
      %s284 = sadd.s32 %s20, %s22
      %p285 = scmp.lt.s32.totalorder %s20, 1
      %s286 = scalar_select %p285, %s20, 1
      %p287 = scmp.lt.s32.totalorder %s22, 0
      %s288 = scalar_select %p287, %s22, 0
      %s289 = sadd.s32 %s288, %s286
      %s290 = scalar_lea.vmem %s3, %s289
      %s291 = sadd.s32 %s20, %s21
      %p292 = scmp.lt.s32.totalorder %s291, 1
      %s293 = scalar_select %p292, %s291, 1
      %s294 = smul.addr %s293, 4
      %s295 = scalar_lea.vmem %s4, %s294
      %s296 = sadd.s32 %s20, %s21
      %p298 = scmp.eq.s32.totalorder %s22, 0
      // Predicated region
      $region37: #{bert_model_forward.20} parent=35 // pred_check
        %p299 = pneg %p298
      $region38: #{bert_model_forward.20} parent=35 // pred_check_branch
        %301 = sbr.rel (%p299) target = $region40
      $region39: #{bert_model_forward.20} parent=35 // pred_region
        %vm302 = vcmask 7168
        %303 = vst.msk [vmem:[#allocation2] sm:$0xff] %vm302, -inf
        %304 = vst.msk [vmem:[#allocation2 + $0x8] sm:$0xff] %vm302, -inf
        %305 = vst.msk [vmem:[#allocation3] sm:$0xff] %vm302, 0.0
        %306 = vst.msk [vmem:[#allocation3 + $0x8] sm:$0xff] %vm302, 0.0
        %vm307 = vcmask 130048
        %308 = vst.msk [vmem:[#allocation4] sm:$0xff] %vm307, 0.0
        %309 = vst.msk [vmem:[#allocation4 + $0x8] sm:$0xff] %vm307, 0.0
      $region40: #{bert_model_forward.20} parent=35 // pred_fallthru
        _
      %v310 = vld [vmem:[%s290] sm:$0x1]
      %v311 = vld [vmem:[%s271] sm:$0xf]
      %v312 = vld [vmem:[%s277] sm:$0xf]
      %v314 = vperm.slane %v310, 0
      %vm316 = vcmask 130048
      %v318 = vsel %vm316, %v311, 0
      %v321 = vsel %vm316, %v312, 0
      %323 = vmatpush.bf16.xpose.msra.mxu0 0
      %324 = vmatpush.bf16.xpose.msra.mxu0 0
      %325 = vmatpush.bf16.xpose.msra.mxu0 0
      %326 = vmatpush.bf16.xpose.msra.mxu0 0
      %327 = vmatpush.bf16.xpose.msra.mxu0 0
      %328 = vmatpush.bf16.xpose.msra.mxu0 0
      %329 = vmatpush.bf16.xpose.msra.mxu0 0
      %330 = vmatpush.bf16.xpose.msra.mxu0 %v321
      %331 = vmatmul.bf16.gmra.mxu0 %v318
      %v332 = vpop.f32.mrf.mxu0
      %v333 = vadd.f32 %v314, %v332
      %v334 = vpop.f32.mrf.mxu0
      %335 = vdwg.mxu0
      %v336 = vld [vmem:[#allocation2] sm:$0xff]
      %vm337 = vcmask 64512
      %v338 = vsel %vm337, %v333, -inf
      %339 = vmax.xlane.f32.xlu0 %v338
      %v340 = vpop.xlane.xlu0 %339
      %v341 = vmax.f32 %v336, %v340
      %v342 = vsub.f32 %v336, %v341
      %v343 = vmul.f32 %v342, 1.442695
      %v344 = vpow.pop %v343
      %346 = vset.pattern.permute.xlu0 0
      %347 = vperm.xlu0 %346, %v341
      %v348 = vpop.permute.xlu0 %347
      %v350 = vsub.f32 %v333, %v348
      %v351 = vmul.f32 %v350, 1.442695
      %v352 = vpow.pop %v351
      %v353 = vld [vmem:[#allocation3] sm:$0xff]
      %v354 = vmul.f32 %v344, %v353
      %v355 = vsel %vm337, %v352, 0.0
      %356 = vadd.xlane.f32.xlu0 %v355
      %v357 = vpop.xlane.xlu0 %356
      %v358 = vadd.f32 %v354, %v357
      %vm359 = vcmask 7168
      %360 = vst.msk [vmem:[#allocation3] sm:$0xff] %vm359, %v358
      %v361 = vpack.c.bf16 %v352, %v352
      %v362 = vld [vmem:[%s283] sm:$0xf]
      %v364 = vsel %vm337, %v361, 0
      %vm366 = vcmask 1043456
      %v368 = vsel %vm366, %v362, 0
      %370 = vmatpush.bf16.msra.mxu0 0
      %371 = vmatpush.bf16.msra.mxu0 0
      %372 = vmatpush.bf16.msra.mxu0 0
      %373 = vmatpush.bf16.msra.mxu0 0
      %374 = vmatpush.bf16.msra.mxu0 0
      %375 = vmatpush.bf16.msra.mxu0 0
      %376 = vmatpush.bf16.msra.mxu0 0
      %377 = vmatpush.bf16.msra.mxu0 %v368
      %378 = vmatmul.bf16.gmra.mxu0 %v364
      %v379 = vpop.f32.mrf.mxu0
      %v380 = vadd.f32 0.0, %v379
      %v381 = vpop.f32.mrf.mxu0
      %382 = vdwg.mxu0
      %v383 = vld [vmem:[#allocation4] sm:$0xff]
      %385 = vset.pattern.permute.xlu0 0
      %386 = vperm.xlu0 %385, %v344
      %v387 = vpop.permute.xlu0 %386
      %v389 = vmul.f32 %v387, %v383
      %v390 = vadd.f32 %v389, %v380
      %391 = vst.msk [vmem:[#allocation4] sm:$0xff] %vm316, %v390
      %392 = vst.msk [vmem:[#allocation2] sm:$0xff] %vm359, %v341
      %v393 = vld [vmem:[%s271] sm:$0xf]
      %v394 = vld [vmem:[%s277] sm:$0xf]
      %v396 = vunpack.c.l.b16 %v393
      %v397 = vpack.c.b16 %v396, %v396
      %398 = vrot.lane.b32.xlu0 %v397, 112
      %v399 = vpop.permute.xlu0 %398
      %v401 = vunpack.c.l.b16 %v394
      %v402 = vpack.c.b16 %v401, %v401
      %403 = vrot.lane.b32.xlu0 %v402, 112
      %v404 = vpop.permute.xlu0 %403
      %v406 = vsel %vm316, %v399, 0
      %v409 = vsel %vm316, %v404, 0
      %411 = vmatpush.bf16.xpose.msra.mxu0 0
      %412 = vmatpush.bf16.xpose.msra.mxu0 0
      %413 = vmatpush.bf16.xpose.msra.mxu0 0
      %414 = vmatpush.bf16.xpose.msra.mxu0 0
      %415 = vmatpush.bf16.xpose.msra.mxu0 0
      %416 = vmatpush.bf16.xpose.msra.mxu0 0
      %417 = vmatpush.bf16.xpose.msra.mxu0 0
      %418 = vmatpush.bf16.xpose.msra.mxu0 %v409
      %419 = vmatmul.bf16.gmra.mxu0 %v406
      %v420 = vpop.f32.mrf.mxu0
      %v421 = vadd.f32 %v314, %v420
      %v422 = vpop.f32.mrf.mxu0
      %423 = vdwg.mxu0
      %s424 = scalar_lea.vmem [#allocation2], 8
      %v425 = vld [vmem:[%s424] sm:$0xff]
      %v426 = vsel %vm337, %v421, -inf
      %427 = vmax.xlane.f32.xlu0 %v426
      %v428 = vpop.xlane.xlu0 %427
      %v429 = vmax.f32 %v425, %v428
      %v430 = vsub.f32 %v425, %v429
      %v431 = vmul.f32 %v430, 1.442695
      %v432 = vpow.pop %v431
      %434 = vset.pattern.permute.xlu0 0
      %435 = vperm.xlu0 %434, %v429
      %v436 = vpop.permute.xlu0 %435
      %v438 = vsub.f32 %v421, %v436
      %v439 = vmul.f32 %v438, 1.442695
      %v440 = vpow.pop %v439
      %s441 = scalar_lea.vmem [#allocation3], 8
      %v442 = vld [vmem:[%s441] sm:$0xff]
      %v443 = vmul.f32 %v432, %v442
      %v444 = vsel %vm337, %v440, 0.0
      %445 = vadd.xlane.f32.xlu0 %v444
      %v446 = vpop.xlane.xlu0 %445
      %v447 = vadd.f32 %v443, %v446
      %448 = vst.msk [vmem:[%s441] sm:$0xff] %vm359, %v447
      %v449 = vpack.c.bf16 %v440, %v440
      %v450 = vld [vmem:[%s283] sm:$0xf]
      %v452 = vunpack.c.l.b16 %v450
      %v453 = vpack.c.b16 %v452, %v452
      %454 = vrot.lane.b32.xlu0 %v453, 112
      %v455 = vpop.permute.xlu0 %454
      %v457 = vsel %vm337, %v449, 0
      %v460 = vsel %vm366, %v455, 0
      %462 = vmatpush.bf16.msra.mxu0 0
      %463 = vmatpush.bf16.msra.mxu0 0
      %464 = vmatpush.bf16.msra.mxu0 0
      %465 = vmatpush.bf16.msra.mxu0 0
      %466 = vmatpush.bf16.msra.mxu0 0
      %467 = vmatpush.bf16.msra.mxu0 0
      %468 = vmatpush.bf16.msra.mxu0 0
      %469 = vmatpush.bf16.msra.mxu0 %v460
      %470 = vmatmul.bf16.gmra.mxu0 %v457
      %v471 = vpop.f32.mrf.mxu0
      %v472 = vadd.f32 0.0, %v471
      %v473 = vpop.f32.mrf.mxu0
      %474 = vdwg.mxu0
      %s475 = scalar_lea.vmem [#allocation4], 8
      %v476 = vld [vmem:[%s475] sm:$0xff]
      %478 = vset.pattern.permute.xlu0 0
      %479 = vperm.xlu0 %478, %v432
      %v480 = vpop.permute.xlu0 %479
      %v482 = vmul.f32 %v480, %v476
      %v483 = vadd.f32 %v482, %v472
      %484 = vst.msk [vmem:[%s475] sm:$0xff] %vm316, %v483
      %485 = vst.msk [vmem:[%s424] sm:$0xff] %vm359, %v429
      // Predicated region
      $region41: #{bert_model_forward.20} parent=35 // pred_check
        %p486 = pneg %p298
      $region42: #{bert_model_forward.20} parent=35 // pred_check_branch
        %488 = sbr.rel (%p486) target = $region44
      $region43: #{bert_model_forward.20} parent=35 // pred_region
        %v489 = vld [vmem:[#allocation3] sm:$0xff]
        %v490 = vrcp.pop %v489
        %v491 = vld [vmem:[#allocation4] sm:$0xff]
        %493 = vset.pattern.permute.xlu0 0
        %494 = vperm.xlu0 %493, %v490
        %v495 = vpop.permute.xlu0 %494
        %v497 = vmul.f32 %v491, %v495
        %v498 = vpack.c.bf16 %v497, %v497
        %vm499 = vcmask 125952
        %500 = vst.msk [vmem:[%s295] sm:$0xf] %vm499, %v498
        %v501 = vld [vmem:[%s441] sm:$0xff]
        %v502 = vrcp.pop %v501
        %v503 = vld [vmem:[%s475] sm:$0xff]
        %505 = vset.pattern.permute.xlu0 0
        %506 = vperm.xlu0 %505, %v502
        %v507 = vpop.permute.xlu0 %506
        %v509 = vmul.f32 %v503, %v507
        %v510 = vpack.c.bf16 %v509, %v509
        %512 = vrot.lane.b32.xlu0 %v510, 16
        %v513 = vpop.permute.xlu0 %512
        %vm515 = vcmask 257152
        %516 = vst.msk [vmem:[%s295] sm:$0xf] %vm515, %v513
      $region44: #{bert_model_forward.20} parent=35 // pred_fallthru
        _
      %s517 = sadd.s32 %s20, %s21
      %p518 = scmp.lt.s32.totalorder %s517, 1
      %s519 = scalar_select %p518, %s517, 1
      %s520 = smul.addr %s519, 4
      %s521 = scalar_lea.vmem %s4, %s520
      // Predicated region
      $region45: #{bert_model_forward.20} parent=35 // pred_check
        %p522 = pneg %p166
      $region46: #{bert_model_forward.20} parent=35 // pred_check_branch
        %524 = sbr.rel (%p522) target = $region48
      $region47: #{bert_model_forward.20} parent=35 // pred_region
        %s525 = sadd.s32 %s20, %s21
      $region48: #{bert_model_forward.20} parent=35 // pred_fallthru
        _
    $region36: #{bert_model_forward.20} parent=5 // pred_fallthru
      _
    %p526 = scmp.le.s32.totalorder 2, %s10
    // Predicated region
    $region49: #{bert_model_forward.20} parent=5 // pred_check
      %p527 = pneg %p526
    $region50: #{bert_model_forward.20} parent=5 // pred_check_branch
      %529 = sbr.rel (%p527) target = $region52
    $region51: #{bert_model_forward.20} parent=5 // pred_region
      %s530 = ssub.s32 %s10, 2
      // Predicated region
      $region53: #{bert_model_forward.20} parent=51 // pred_check
        %p531 = pneg %p172
      $region54: #{bert_model_forward.20} parent=51 // pred_check_branch
        %533 = sbr.rel (%p531) target = $region56
      $region55: #{bert_model_forward.20} parent=51 // pred_region
        %s534 = sadd.s32 %s23, %s24
        %p535 = scmp.lt.s32.totalorder %s534, 1
        %s536 = scalar_select %p535, %s534, 1
        %s537 = smul.addr %s536, 4
        %s538 = scalar_lea.vmem %s4, %s537
      $region56: #{bert_model_forward.20} parent=51 // pred_fallthru
        _
    $region52: #{bert_model_forward.20} parent=5 // pred_fallthru
      _
  $region6: #{bert_model_forward.20} parent=0 // loop_footer
    %s14 = sadd.s32 1, %s10
  $region7: #{bert_model_forward.20} parent=0 // loop_footer_branch
    %9 = sbr.rel target = $region3
  $region8: #{bert_model_forward.20} parent=0 // loop_exit
    _

// kernel: bert_model_forward.22
$region0: #{bert_model_forward.22}
  #allocation0 [shape = 'u32[]', space=smem, size = 0x4, offset = 0x4, fixed_abs, tag = 'smem constant byte address 0x4 - core index']
  #allocation1 [shape = 'u32[72,128]{1,0:T(1,128)}', space=vmem, size = 0x9000, scoped, tag = 'internal scratch']
  #allocation2 [shape = 'f32[16,64]{1,0:T(8,128)}', space=vmem, size = 0x2000, scoped, tag = 'scratch operand']
  %s0 = inlined_call_operand.vmem [shape: bf16[16,32], index: 0, kind: input, shape index: {}]
  %s1 = inlined_call_operand.vmem [shape: bf16[32,64], index: 1, kind: input, shape index: {}]
  %s2 = inlined_call_operand.vmem [shape: f32[1,64], index: 2, kind: input, shape index: {}]
  %s3 = inlined_call_operand.vmem [shape: bf16[16,64], index: 3, kind: output, shape index: {}]
  %s4 = sld [smem:[#allocation0]]
  $region30: #{bert_model_forward.22} parent=0
    _
  %s6 = ssub.s32 1, %s4
  %s7 = scalar_select 0, %s6, %s4
  // Predicated region
  $region2: #{bert_model_forward.22} parent=0 // pred_check
    _
  $region3: #{bert_model_forward.22} parent=0 // pred_check_branch
    %9 = sbr.rel (0) target = $region5
  $region4: #{bert_model_forward.22} parent=0 // pred_region
    _
  $region5: #{bert_model_forward.22} parent=0 // pred_fallthru
    _
  // Predicated region
  $region6: #{bert_model_forward.22} parent=0 // pred_check
    _
  $region7: #{bert_model_forward.22} parent=0 // pred_check_branch
    %11 = sbr.rel (0) target = $region9
  $region8: #{bert_model_forward.22} parent=0 // pred_region
    _
  $region9: #{bert_model_forward.22} parent=0 // pred_fallthru
    _
  // Predicated region
  $region10: #{bert_model_forward.22} parent=0 // pred_check
    _
  $region11: #{bert_model_forward.22} parent=0 // pred_check_branch
    %13 = sbr.rel (0) target = $region13
  $region12: #{bert_model_forward.22} parent=0 // pred_region
    _
  $region13: #{bert_model_forward.22} parent=0 // pred_fallthru
    _
  %p15 = scmp.eq.s32.totalorder 0, 0
  // Predicated region
  $region14: #{bert_model_forward.22} parent=0 // pred_check
    %p16 = pneg %p15
  $region15: #{bert_model_forward.22} parent=0 // pred_check_branch
    %18 = sbr.rel (%p16) target = $region17
  $region16: #{bert_model_forward.22} parent=0 // pred_region
    %vm19 = vcmask 523264
    %20 = vst.msk [vmem:[#allocation2] sm:$0xff] %vm19, 0.0
    %21 = vst.msk [vmem:[#allocation2 + $0x8] sm:$0xff] %vm19, 0.0
  $region17: #{bert_model_forward.22} parent=0 // pred_fallthru
    _
  %v22 = vld [vmem:[#allocation2] sm:$0xff]
  %v23 = vld [vmem:[#allocation2 + $0x8] sm:$0xff]
  %v24 = vld [vmem:[%s0] sm:$0xf]
  %v25 = vld [vmem:[%s0 + $0x4] sm:$0xf]
  %v26 = vld [vmem:[%s1] sm:$0xf]
  %v27 = vld [vmem:[%s1 + $0x4] sm:$0xf]
  %v28 = vld [vmem:[%s1 + $0x8] sm:$0xf]
  %v29 = vld [vmem:[%s1 + $0xc] sm:$0xf]
  %v32 = vunpack.c.l.b16 %v24
  %v33 = vunpack.c.l.b16 %v25
  %v34 = vpack.c.b16 %v33, %v32
  %v39 = vunpack.c.l.b16 %v26
  %v40 = vunpack.c.l.b16 %v27
  %v41 = vunpack.c.l.b16 %v28
  %v42 = vunpack.c.l.b16 %v29
  %v43 = vpack.c.b16 %v40, %v39
  %v44 = vpack.c.b16 %v42, %v41
  %vm47 = vcmask 261120
  %v49 = vsel %vm47, %v34, 0
  %51 = vmatpush.bf16.msra.mxu0 0
  %52 = vmatpush.bf16.msra.mxu0 0
  %53 = vmatpush.bf16.msra.mxu0 0
  %54 = vmatpush.bf16.msra.mxu0 0
  %55 = vmatpush.bf16.msra.mxu0 0
  %56 = vmatpush.bf16.msra.mxu0 0
  %57 = vmatpush.bf16.msra.mxu0 %v44
  %58 = vmatpush.bf16.msra.mxu0 %v43
  %59 = vmatmul.bf16.gmra.mxu0 %v49
  %v60 = vpop.f32.mrf.mxu0
  %v61 = vadd.f32 0.0, %v60
  %v62 = vpop.f32.mrf.mxu0
  %v63 = vadd.f32 0.0, %v62
  %64 = vdwg.mxu0
  %v65 = vadd.f32 %v22, %v61
  %v66 = vadd.f32 %v23, %v63
  %vm67 = vcmask 523264
  %68 = vst.msk [vmem:[#allocation2] sm:$0xff] %vm67, %v65
  %69 = vst.msk [vmem:[#allocation2 + $0x8] sm:$0xff] %vm67, %v66
  // Predicated region
  $region18: #{bert_model_forward.22} parent=0 // pred_check
    %p70 = pneg %p15
  $region19: #{bert_model_forward.22} parent=0 // pred_check_branch
    %72 = sbr.rel (%p70) target = $region21
  $region20: #{bert_model_forward.22} parent=0 // pred_region
    %v73 = vld [vmem:[#allocation2] sm:$0xff]
    %v74 = vld [vmem:[#allocation2 + $0x8] sm:$0xff]
    %v75 = vld [vmem:[%s2] sm:$0x1]
    %v77 = vperm.slane %v75, 0
    %v79 = vadd.f32 %v73, %v77
    %v80 = vadd.f32 %v74, %v77
    %v81 = vmul.f32 %v79, %v79
    %v82 = vmul.f32 %v80, %v80
    %v83 = vmul.f32 %v79, %v81
    %v84 = vmul.f32 %v80, %v82
    %v85 = vmul.f32 %v83, 0.044715
    %v86 = vmul.f32 %v84, 0.044715
    %v87 = vadd.f32 %v79, %v85
    %v88 = vadd.f32 %v80, %v86
    %v89 = vmul.f32 %v87, 0.7978846
    %v90 = vmul.f32 %v88, 0.7978846
    %v91 = vtanh.pop %v89
    %v92 = vtanh.pop %v90
    %v93 = vadd.f32 %v91, 1.0
    %v94 = vadd.f32 %v92, 1.0
    %v95 = vmul.f32 %v93, 0.5
    %v96 = vmul.f32 %v94, 0.5
    %v97 = vmul.f32 %v79, %v95
    %v98 = vmul.f32 %v80, %v96
    %v99 = vpack.c.bf16 %v97, %v97
    %v100 = vpack.c.bf16 %v98, %v98
    %vm101 = vcmask 519168
    %102 = vst.msk [vmem:[%s3] sm:$0xf] %vm101, %v99
    %103 = vst.msk [vmem:[%s3 + $0x4] sm:$0xf] %vm101, %v100
  $region21: #{bert_model_forward.22} parent=0 // pred_fallthru
    _
  // Predicated region
  $region22: #{bert_model_forward.22} parent=0 // pred_check
    _
  $region23: #{bert_model_forward.22} parent=0 // pred_check_branch
    %105 = sbr.rel (0) target = $region25
  $region24: #{bert_model_forward.22} parent=0 // pred_region
    _
  $region25: #{bert_model_forward.22} parent=0 // pred_fallthru
    _
  // Predicated region
  $region26: #{bert_model_forward.22} parent=0 // pred_check
    _
  $region27: #{bert_model_forward.22} parent=0 // pred_check_branch
    %107 = sbr.rel (0) target = $region29
  $region28: #{bert_model_forward.22} parent=0 // pred_region
    _
  $region29: #{bert_model_forward.22} parent=0 // pred_fallthru
    _

// kernel: bert_model_forward.23
$region0: #{bert_model_forward.23}
  #allocation0 [shape = 'u32[]', space=smem, size = 0x4, offset = 0x4, fixed_abs, tag = 'smem constant byte address 0x4 - core index']
  #allocation1 [shape = 'u32[72,128]{1,0:T(1,128)}', space=vmem, size = 0x9000, scoped, tag = 'internal scratch']
  #allocation2 [shape = 'f32[16,32]{1,0:T(8,128)}', space=vmem, size = 0x2000, scoped, tag = 'scratch operand']
  %s0 = inlined_call_operand.vmem [shape: bf16[16,64], index: 0, kind: input, shape index: {}]
  %s1 = inlined_call_operand.vmem [shape: bf16[64,32], index: 1, kind: input, shape index: {}]
  %s2 = inlined_call_operand.vmem [shape: f32[1,32], index: 2, kind: input, shape index: {}]
  %s3 = inlined_call_operand.vmem [shape: bf16[16,32], index: 3, kind: input, shape index: {}]
  %s4 = inlined_call_operand.vmem [shape: f32[1,32], index: 4, kind: input, shape index: {}]
  %s5 = inlined_call_operand.vmem [shape: f32[1,32], index: 5, kind: input, shape index: {}]
  %s6 = inlined_call_operand.vmem [shape: bf16[16,32], index: 6, kind: output, shape index: {}]
  %s7 = sld [smem:[#allocation0]]
  $region42: #{bert_model_forward.23} parent=0
    _
  %s9 = ssub.s32 1, %s7
  %s10 = scalar_select 0, %s9, %s7
  // Predicated region
  $region2: #{bert_model_forward.23} parent=0 // pred_check
    _
  $region3: #{bert_model_forward.23} parent=0 // pred_check_branch
    %12 = sbr.rel (0) target = $region5
  $region4: #{bert_model_forward.23} parent=0 // pred_region
    _
  $region5: #{bert_model_forward.23} parent=0 // pred_fallthru
    _
  // Predicated region
  $region6: #{bert_model_forward.23} parent=0 // pred_check
    _
  $region7: #{bert_model_forward.23} parent=0 // pred_check_branch
    %14 = sbr.rel (0) target = $region9
  $region8: #{bert_model_forward.23} parent=0 // pred_region
    _
  $region9: #{bert_model_forward.23} parent=0 // pred_fallthru
    _
  // Predicated region
  $region10: #{bert_model_forward.23} parent=0 // pred_check
    _
  $region11: #{bert_model_forward.23} parent=0 // pred_check_branch
    %16 = sbr.rel (0) target = $region13
  $region12: #{bert_model_forward.23} parent=0 // pred_region
    _
  $region13: #{bert_model_forward.23} parent=0 // pred_fallthru
    _
  // Predicated region
  $region14: #{bert_model_forward.23} parent=0 // pred_check
    _
  $region15: #{bert_model_forward.23} parent=0 // pred_check_branch
    %18 = sbr.rel (0) target = $region17
  $region16: #{bert_model_forward.23} parent=0 // pred_region
    _
  $region17: #{bert_model_forward.23} parent=0 // pred_fallthru
    _
  // Predicated region
  $region18: #{bert_model_forward.23} parent=0 // pred_check
    _
  $region19: #{bert_model_forward.23} parent=0 // pred_check_branch
    %20 = sbr.rel (0) target = $region21
  $region20: #{bert_model_forward.23} parent=0 // pred_region
    _
  $region21: #{bert_model_forward.23} parent=0 // pred_fallthru
    _
  // Predicated region
  $region22: #{bert_model_forward.23} parent=0 // pred_check
    _
  $region23: #{bert_model_forward.23} parent=0 // pred_check_branch
    %22 = sbr.rel (0) target = $region25
  $region24: #{bert_model_forward.23} parent=0 // pred_region
    _
  $region25: #{bert_model_forward.23} parent=0 // pred_fallthru
    _
  %p24 = scmp.eq.s32.totalorder 0, 0
  // Predicated region
  $region26: #{bert_model_forward.23} parent=0 // pred_check
    %p25 = pneg %p24
  $region27: #{bert_model_forward.23} parent=0 // pred_check_branch
    %27 = sbr.rel (%p25) target = $region29
  $region28: #{bert_model_forward.23} parent=0 // pred_region
    %vm28 = vcmask 261120
    %29 = vst.msk [vmem:[#allocation2] sm:$0xff] %vm28, 0.0
    %30 = vst.msk [vmem:[#allocation2 + $0x8] sm:$0xff] %vm28, 0.0
  $region29: #{bert_model_forward.23} parent=0 // pred_fallthru
    _
  %v31 = vld [vmem:[#allocation2] sm:$0xff]
  %v32 = vld [vmem:[#allocation2 + $0x8] sm:$0xff]
  %v33 = vld [vmem:[%s0] sm:$0xf]
  %v34 = vld [vmem:[%s0 + $0x4] sm:$0xf]
  %v35 = vld [vmem:[%s1] sm:$0xf]
  %v36 = vld [vmem:[%s1 + $0x4] sm:$0xf]
  %v37 = vld [vmem:[%s1 + $0x8] sm:$0xf]
  %v38 = vld [vmem:[%s1 + $0xc] sm:$0xf]
  %v39 = vld [vmem:[%s1 + $0x10] sm:$0xf]
  %v40 = vld [vmem:[%s1 + $0x14] sm:$0xf]
  %v41 = vld [vmem:[%s1 + $0x18] sm:$0xf]
  %v42 = vld [vmem:[%s1 + $0x1c] sm:$0xf]
  %v45 = vunpack.c.l.b16 %v33
  %v46 = vunpack.c.l.b16 %v34
  %v47 = vpack.c.b16 %v46, %v45
  %v56 = vunpack.c.l.b16 %v35
  %v57 = vunpack.c.l.b16 %v36
  %v58 = vunpack.c.l.b16 %v37
  %v59 = vunpack.c.l.b16 %v38
  %v60 = vunpack.c.l.b16 %v39
  %v61 = vunpack.c.l.b16 %v40
  %v62 = vunpack.c.l.b16 %v41
  %v63 = vunpack.c.l.b16 %v42
  %v64 = vpack.c.b16 %v57, %v56
  %v65 = vpack.c.b16 %v59, %v58
  %v66 = vpack.c.b16 %v61, %v60
  %v67 = vpack.c.b16 %v63, %v62
  %vm72 = vcmask 523264
  %v74 = vsel %vm72, %v47, 0
  %76 = vmatpush.bf16.msra.mxu0 0
  %77 = vmatpush.bf16.msra.mxu0 0
  %78 = vmatpush.bf16.msra.mxu0 0
  %79 = vmatpush.bf16.msra.mxu0 0
  %80 = vmatpush.bf16.msra.mxu0 %v67
  %81 = vmatpush.bf16.msra.mxu0 %v66
  %82 = vmatpush.bf16.msra.mxu0 %v65
  %83 = vmatpush.bf16.msra.mxu0 %v64
  %84 = vmatmul.bf16.gmra.mxu0 %v74
  %v85 = vpop.f32.mrf.mxu0
  %v86 = vadd.f32 0.0, %v85
  %v87 = vpop.f32.mrf.mxu0
  %v88 = vadd.f32 0.0, %v87
  %89 = vdwg.mxu0
  %v90 = vadd.f32 %v31, %v86
  %v91 = vadd.f32 %v32, %v88
  %vm92 = vcmask 261120
  %93 = vst.msk [vmem:[#allocation2] sm:$0xff] %vm92, %v90
  %94 = vst.msk [vmem:[#allocation2 + $0x8] sm:$0xff] %vm92, %v91
  // Predicated region
  $region30: #{bert_model_forward.23} parent=0 // pred_check
    %p95 = pneg %p24
  $region31: #{bert_model_forward.23} parent=0 // pred_check_branch
    %97 = sbr.rel (%p95) target = $region33
  $region32: #{bert_model_forward.23} parent=0 // pred_region
    %v98 = vld [vmem:[#allocation2] sm:$0xff]
    %v99 = vld [vmem:[#allocation2 + $0x8] sm:$0xff]
    %v100 = vld [vmem:[%s2] sm:$0x1]
    %v102 = vperm.slane %v100, 0
    %v104 = vadd.f32 %v98, %v102
    %v105 = vadd.f32 %v99, %v102
    %v106 = vld [vmem:[%s3] sm:$0xf]
    %v107 = vld [vmem:[%s3 + $0x4] sm:$0xf]
    %v108 = vunpack.c.l.bf16 %v106
    %v109 = vunpack.c.l.bf16 %v107
    %v110 = vadd.f32 %v104, %v108
    %v111 = vadd.f32 %v105, %v109
    %v112 = vsel %vm92, %v110, 0.0
    %113 = vadd.xlane.f32.xlu0 %v112
    %v114 = vpop.xlane.xlu0 %113
    %v115 = vsel %vm92, %v111, 0.0
    %116 = vadd.xlane.f32.xlu0 %v115
    %v117 = vpop.xlane.xlu0 %116
    %v118 = vrcp.pop 32.0
    %v119 = vmul.f32 32.0, %v118
    %v120 = vsub.f32 1.0, %v119
    %v121 = vmul.f32 %v118, %v120
    %v122 = vadd.f32 %v118, %v121
    %vm123 = vweird.f32 %v118
    %v124 = vsel %vm123, %v118, %v122
    %v125 = vmul.f32 %v114, %v124
    %v126 = vmul.f32 %v117, %v124
    %v127 = vmul.f32 %v110, %v110
    %v128 = vmul.f32 %v111, %v111
    %v129 = vsel %vm92, %v127, 0.0
    %130 = vadd.xlane.f32.xlu0 %v129
    %v131 = vpop.xlane.xlu0 %130
    %v132 = vsel %vm92, %v128, 0.0
    %133 = vadd.xlane.f32.xlu0 %v132
    %v134 = vpop.xlane.xlu0 %133
    %v135 = vmul.f32 %v131, %v124
    %v136 = vmul.f32 %v134, %v124
    %v137 = vmul.f32 %v125, %v125
    %v138 = vmul.f32 %v126, %v126
    %v139 = vsub.f32 %v135, %v137
    %v140 = vsub.f32 %v136, %v138
    %v141 = vmax.f32 %v139, 0.0
    %v142 = vmax.f32 %v140, 0.0
    %v143 = vsub.f32 %v110, %v125
    %v144 = vsub.f32 %v111, %v126
    %v145 = vadd.f32 %v141, 1e-12
    %v146 = vadd.f32 %v142, 1e-12
    %v147 = vrsqrt.pop %v145
    %v148 = vmul.f32 %v147, %v145
    %v149 = vmul.f32 %v148, %v147
    %v150 = vmul.f32 0.5, %v149
    %v151 = vsub.f32 1.5, %v150
    %v152 = vmul.f32 %v147, %v151
    %vm153 = vweird.f32 %v145
    %vm154 = vweird.f32 %v147
    %vm155 = vmor %vm153, %vm154
    %v156 = vsel %vm155, %v147, %v152
    %v157 = vrsqrt.pop %v146
    %v158 = vmul.f32 %v157, %v146
    %v159 = vmul.f32 %v158, %v157
    %v160 = vmul.f32 0.5, %v159
    %v161 = vsub.f32 1.5, %v160
    %v162 = vmul.f32 %v157, %v161
    %vm163 = vweird.f32 %v146
    %vm164 = vweird.f32 %v157
    %vm165 = vmor %vm163, %vm164
    %v166 = vsel %vm165, %v157, %v162
    %v167 = vmul.f32 %v143, %v156
    %v168 = vmul.f32 %v144, %v166
    %v169 = vld [vmem:[%s4] sm:$0x1]
    %v171 = vperm.slane %v169, 0
    %v173 = vmul.f32 %v167, %v171
    %v174 = vmul.f32 %v168, %v171
    %v175 = vld [vmem:[%s5] sm:$0x1]
    %v177 = vperm.slane %v175, 0
    %v179 = vadd.f32 %v173, %v177
    %v180 = vadd.f32 %v174, %v177
    %v181 = vpack.c.bf16 %v179, %v179
    %v182 = vpack.c.bf16 %v180, %v180
    %vm183 = vcmask 257024
    %184 = vst.msk [vmem:[%s6] sm:$0xf] %vm183, %v181
    %185 = vst.msk [vmem:[%s6 + $0x4] sm:$0xf] %vm183, %v182
  $region33: #{bert_model_forward.23} parent=0 // pred_fallthru
    _
  // Predicated region
  $region34: #{bert_model_forward.23} parent=0 // pred_check
    _
  $region35: #{bert_model_forward.23} parent=0 // pred_check_branch
    %187 = sbr.rel (0) target = $region37
  $region36: #{bert_model_forward.23} parent=0 // pred_region
    _
  $region37: #{bert_model_forward.23} parent=0 // pred_fallthru
    _
  // Predicated region
  $region38: #{bert_model_forward.23} parent=0 // pred_check
    _
  $region39: #{bert_model_forward.23} parent=0 // pred_check_branch
    %189 = sbr.rel (0) target = $region41
  $region40: #{bert_model_forward.23} parent=0 // pred_region
    _
  $region41: #{bert_model_forward.23} parent=0 // pred_fallthru
    _

// kernel: bert_model_forward.31
$region0: #{bert_model_forward.31}
  #allocation0 [shape = 'u32[]', space=smem, size = 0x4, offset = 0x4, fixed_abs, tag = 'smem constant byte address 0x4 - core index']
  #allocation1 [shape = 'u32[72,128]{1,0:T(1,128)}', space=vmem, size = 0x9000, scoped, tag = 'internal scratch']
  %s0 = inlined_call_operand.vmem [shape: bf16[16,32], index: 0, kind: input, shape index: {}]
  %s1 = inlined_call_operand.vmem [shape: bf16[32,2], index: 1, kind: input, shape index: {}]
  %s2 = inlined_call_operand.vmem [shape: f32[1,2], index: 2, kind: input, shape index: {}]
  %s3 = inlined_call_operand.vmem [shape: s32[16,1], index: 3, kind: input, shape index: {}]
  %s4 = inlined_call_operand.vmem [shape: f32[16,2], index: 4, kind: output, shape index: {0}]
  %s5 = inlined_call_operand.vmem [shape: f32[1,2], index: 5, kind: output, shape index: {1}]
  %6 = xla_tuple %s4, %s5
  %s7 = sld [smem:[#allocation0]]
  $region34: #{bert_model_forward.31} parent=0
    _
  %s9 = ssub.s32 1, %s7
  %s10 = scalar_select 0, %s9, %s7
  $region1: #{bert_model_forward.31} parent=0
    #allocation2 [shape = 'u8[512]{0}', space=smem, size = 0x200, scoped, tag = 'output window, operand 1, single buffered']
    #allocation3 [shape = 's32[1]{0}', space=sflag, size = 0x4, scoped, tag = 'scoped memory for bert_model_forward.31']
    %11 = vsyncpa [#allocation3], 0
    // Predicated region
    $region2: #{bert_model_forward.31} parent=1 // pred_check
      _
    $region3: #{bert_model_forward.31} parent=1 // pred_check_branch
      %13 = sbr.rel (0) target = $region5
    $region4: #{bert_model_forward.31} parent=1 // pred_region
      _
    $region5: #{bert_model_forward.31} parent=1 // pred_fallthru
      _
    // Predicated region
    $region6: #{bert_model_forward.31} parent=1 // pred_check
      _
    $region7: #{bert_model_forward.31} parent=1 // pred_check_branch
      %15 = sbr.rel (0) target = $region9
    $region8: #{bert_model_forward.31} parent=1 // pred_region
      _
    $region9: #{bert_model_forward.31} parent=1 // pred_fallthru
      _
    // Predicated region
    $region10: #{bert_model_forward.31} parent=1 // pred_check
      _
    $region11: #{bert_model_forward.31} parent=1 // pred_check_branch
      %17 = sbr.rel (0) target = $region13
    $region12: #{bert_model_forward.31} parent=1 // pred_region
      _
    $region13: #{bert_model_forward.31} parent=1 // pred_fallthru
      _
    // Predicated region
    $region14: #{bert_model_forward.31} parent=1 // pred_check
      _
    $region15: #{bert_model_forward.31} parent=1 // pred_check_branch
      %19 = sbr.rel (0) target = $region17
    $region16: #{bert_model_forward.31} parent=1 // pred_region
      _
    $region17: #{bert_model_forward.31} parent=1 // pred_fallthru
      _
    %v21 = vld [vmem:[%s0] sm:$0xf]
    %v22 = vld [vmem:[%s0 + $0x4] sm:$0xf]
    %v23 = vld [vmem:[%s1] sm:$0xf]
    %v24 = vld [vmem:[%s1 + $0x4] sm:$0xf]
    %v25 = vld [vmem:[%s1 + $0x8] sm:$0xf]
    %v26 = vld [vmem:[%s1 + $0xc] sm:$0xf]
    %v27 = vld [vmem:[%s2] sm:$0x1]
    %v29 = vperm.slane %v27, 0
    %v33 = vunpack.c.l.b16 %v21
    %v34 = vunpack.c.l.b16 %v22
    %v35 = vpack.c.b16 %v34, %v33
    %v40 = vunpack.c.l.b16 %v23
    %v41 = vunpack.c.l.b16 %v24
    %v42 = vunpack.c.l.b16 %v25
    %v43 = vunpack.c.l.b16 %v26
    %v44 = vpack.c.b16 %v41, %v40
    %v45 = vpack.c.b16 %v43, %v42
    %vm48 = vcmask 261120
    %v50 = vsel %vm48, %v35, 0
    %52 = vmatpush.bf16.msra.mxu0 0
    %53 = vmatpush.bf16.msra.mxu0 0
    %54 = vmatpush.bf16.msra.mxu0 0
    %55 = vmatpush.bf16.msra.mxu0 0
    %56 = vmatpush.bf16.msra.mxu0 0
    %57 = vmatpush.bf16.msra.mxu0 0
    %58 = vmatpush.bf16.msra.mxu0 %v45
    %59 = vmatpush.bf16.msra.mxu0 %v44
    %60 = vmatmul.bf16.gmra.mxu0 %v50
    %v61 = vpop.f32.mrf.mxu0
    %v62 = vadd.f32 %v29, %v61
    %v63 = vpop.f32.mrf.mxu0
    %v64 = vadd.f32 %v29, %v63
    %65 = vdwg.mxu0
    %vm66 = vcmask 15360
    %67 = vst.msk [vmem:[%s4] sm:$0xff] %vm66, %v62
    %68 = vst.msk [vmem:[%s4 + $0x8] sm:$0xff] %vm66, %v64
    %v69 = vld [vmem:[%s3] sm:$0xff]
    %v70 = vld [vmem:[%s3 + $0x8] sm:$0xff]
    %v71 = vsel %vm66, %v62, -inf
    %72 = vmax.xlane.f32.xlu0 %v71
    %v73 = vpop.xlane.xlu0 %72
    %v74 = vsel %vm66, %v64, -inf
    %75 = vmax.xlane.f32.xlu0 %v74
    %v76 = vpop.xlane.xlu0 %75
    %v77 = vsub.f32 %v62, %v73
    %v78 = vsub.f32 %v64, %v76
    %v79 = vmul.f32 %v77, 1.442695
    %v80 = vpow.pop %v79
    %v81 = vmul.f32 %v78, 1.442695
    %v82 = vpow.pop %v81
    %v83 = vsel %vm66, %v80, 0.0
    %84 = vadd.xlane.f32.xlu0 %v83
    %v85 = vpop.xlane.xlu0 %84
    %v86 = vsel %vm66, %v82, 0.0
    %87 = vadd.xlane.f32.xlu0 %v86
    %v88 = vpop.xlane.xlu0 %87
    %v89 = vlog2.pop %v85
    %v90 = vmul.f32 %v89, 0.6931472
    %v91 = vlog2.pop %v88
    %v92 = vmul.f32 %v91, 0.6931472
    %v93 = vadd.f32 %v73, %v90
    %v94 = vadd.f32 %v76, %v92
    %v95 = vsub.f32 %v62, %v93
    %v96 = vsub.f32 %v64, %v94
    %vm97 = vcmp.ne.s32.totalorder %v69, 4294967196
    %vm98 = vcmp.ne.s32.totalorder %v70, 4294967196
    %v99 = vsel %vm97, %v69, 0
    %v100 = vsel %vm98, %v70, 0
    %v101 = vlaneseq
    %v102 = vand.u32 %v101, 127
    %103 = vset.pattern.permute.xlu0 0
    %104 = vperm.xlu0 %103, %v99
    %v105 = vpop.permute.xlu0 %104
    %106 = vset.pattern.permute.xlu0 0
    %107 = vperm.xlu0 %106, %v100
    %v108 = vpop.permute.xlu0 %107
    %vm109 = vcmp.eq.s32.totalorder %v102, %v105
    %vm110 = vcmp.eq.s32.totalorder %v102, %v108
    %v111 = vsel %vm109, %v95, 0.0
    %v112 = vsel %vm110, %v96, 0.0
    %v113 = vsel %vm66, %v111, 0.0
    %114 = vadd.xlane.f32.xlu0 %v113
    %v115 = vpop.xlane.xlu0 %114
    %v116 = vsel %vm66, %v112, 0.0
    %117 = vadd.xlane.f32.xlu0 %v116
    %v118 = vpop.xlane.xlu0 %117
    %v119 = vsub.f32 0.0, %v115
    %v120 = vsub.f32 0.0, %v118
    %v121 = vsel %vm97, %v119, 0.0
    %v122 = vsel %vm98, %v120, 0.0
    %vm123 = vcmask 7168
    %v124 = vsel %vm123, %v121, 0.0
    %v125 = vsel %vm123, %v122, 0.0
    %v126 = vadd.f32 %v124, %v125
    %127 = vadd.xlane.f32.xlu0 %v126
    %v128 = vpop.xlane.xlu0 %127
    %v129 = vrot.slane %v128, 4
    %v130 = vadd.f32 %v128, %v129
    %v131 = vrot.slane %v130, 2
    %v132 = vadd.f32 %v130, %v131
    %v133 = vrot.slane %v132, 1
    %v134 = vadd.f32 %v132, %v133
    %s135 = vtos %v134
    %s136 = scalar_lea.smem [#allocation2], 0
    %137 = sst [smem:[%s136]] %s135
    %v138 = vsel %vm97, 1, 0
    %v139 = vsel %vm98, 1, 0
    %v140 = vcvt.s32.f32 %v138
    %v141 = vcvt.s32.f32 %v139
    %v142 = vsel %vm123, %v140, 0.0
    %v143 = vsel %vm123, %v141, 0.0
    %v144 = vadd.f32 %v142, %v143
    %145 = vadd.xlane.f32.xlu0 %v144
    %v146 = vpop.xlane.xlu0 %145
    %v147 = vrot.slane %v146, 4
    %v148 = vadd.f32 %v146, %v147
    %v149 = vrot.slane %v148, 2
    %v150 = vadd.f32 %v148, %v149
    %v151 = vrot.slane %v150, 1
    %v152 = vadd.f32 %v150, %v151
    %s153 = vtos %v152
    %s154 = scalar_lea.smem [#allocation2], 1
    %155 = sst [smem:[%s154]] %s153
    // Predicated region
    $region18: #{bert_model_forward.31} parent=1 // pred_check
      _
    $region19: #{bert_model_forward.31} parent=1 // pred_check_branch
      %157 = sbr.rel (0) target = $region21
    $region20: #{bert_model_forward.31} parent=1 // pred_region
      _
    $region21: #{bert_model_forward.31} parent=1 // pred_fallthru
      _
    // Predicated region
    $region22: #{bert_model_forward.31} parent=1 // pred_check
      _
    $region23: #{bert_model_forward.31} parent=1 // pred_check_branch
      %159 = sbr.rel (0) target = $region25
    $region24: #{bert_model_forward.31} parent=1 // pred_region
      %161 = vsyncadd [#allocation3], 0
      %s163 = sshll.u32 %s5, 4
      %s164 = int_to_ptr.vmem [resolvable:$true] %s163
      %166 = dma.smem_to_vmem [#allocation2], 16, %s164, [#allocation3]
    $region25: #{bert_model_forward.31} parent=1 // pred_fallthru
      _
    // Predicated region
    $region26: #{bert_model_forward.31} parent=1 // pred_check
      _
    $region27: #{bert_model_forward.31} parent=1 // pred_check_branch
      %168 = sbr.rel (0) target = $region29
    $region28: #{bert_model_forward.31} parent=1 // pred_region
      _
    $region29: #{bert_model_forward.31} parent=1 // pred_fallthru
      _
    // Predicated region
    $region30: #{bert_model_forward.31} parent=1 // pred_check
      _
    $region31: #{bert_model_forward.31} parent=1 // pred_check_branch
      %170 = sbr.rel (0) target = $region33
    $region32: #{bert_model_forward.31} parent=1 // pred_region
      %172 = dma.done [#allocation3], 16
    $region33: #{bert_model_forward.31} parent=1 // pred_fallthru
      _
    %173 = sfence
    %174 = vsyncpa [#allocation3], 1

</llo_original>
